<compile_context>
chip_gen: v6e
topology: v6e:2x2x1
jax: 0.10.0
libtpu: 0.0.40
codegen_flags: <defaults>
</compile_context>

<pallas_src>
import functools

import jax
import jax.numpy as jnp
from jax import lax
from jax.experimental import pallas as pl
from jax.experimental.pallas import tpu as pltpu


def _fused_rnn_kernel(x_ref, w_ih_ref, w_hh_ref, b_ih_ref, b_hh_ref,
                      w_out_ref, b_out_ref, o_ref, h_scr, *, seq_len):
    """Fused RNN forward, fully resident in VMEM.

    x_ref    : (B*T, I)  flattened batch-major input (row = b*T + t)
    w_ih_ref : (H, I)    PyTorch layout (consumed via dot_general, no transpose)
    w_hh_ref : (H, H)    PyTorch layout
    b_*_ref  : (1, H)/(1, O) biases
    w_out_ref: (O, H)    PyTorch layout
    o_ref    : (B*T, O)  output (row = b*T + t)
    h_scr    : (B*T, H)  VMEM scratch holding all hidden states
    """
    f32 = jnp.float32
    # Contract last dim of lhs with last dim of rhs  ==  lhs @ rhs.T
    dn_t = (((1,), (1,)), ((), ()))

    bt = x_ref.shape[0]
    hdim = w_hh_ref.shape[0]
    T = seq_len
    B = bt // T

    # ---- Input projection: one (B*T, I) x (H, I)^T matmul, biases pre-summed ----
    xp = lax.dot_general(x_ref[...], w_ih_ref[...], dn_t,
                         preferred_element_type=f32)
    xp = xp + b_ih_ref[...] + b_hh_ref[...]                    # (B*T, H)

    w_hh = w_hh_ref[...]                                       # (H, H)

    # ---- Serial tanh recurrence, fully unrolled (T, B tiny & static). ----
    # Per-batch chains are independent; the unrolled code lets the scheduler
    # interleave them, so wall time ~= one chain's MXU+tanh latency chain.
    for b in range(B):
        h = jnp.zeros((1, hdim), f32)
        for t in range(T):
            r = b * T + t
            pre = xp[r:r + 1, :] + lax.dot_general(
                h, w_hh, dn_t, preferred_element_type=f32)
            h = jnp.tanh(pre)                                  # f32 tanh on the EUP
            h_scr[r:r + 1, :] = h                              # single contiguous row store

    # ---- Output projection: one (B*T, H) x (O, H)^T matmul + bias, one store ----
    y = lax.dot_general(h_scr[...], w_out_ref[...], dn_t,
                        preferred_element_type=f32)
    o_ref[...] = y + b_out_ref[...]


def rnn_forward(x_btc, w_ih, w_hh, b_ih, b_hh, w_out, b_out):
    """x_btc: (B, T, I). Weights in PyTorch convention:
       w_ih (H, I), w_hh (H, H), b_ih (H,), b_hh (H,), w_out (O, H), b_out (O,).
       Returns (B, T, O), matching RNN.forward of the reference module (num_layers=1)."""
    B, T, I = x_btc.shape
    H = w_ih.shape[0]
    O = w_out.shape[0]
    f32 = jnp.float32

    # Only free (row-major, leading-dim) reshapes in the wrapper -- no transposes.
    x2 = x_btc.astype(f32).reshape(B * T, I)
    b_ih2 = b_ih.astype(f32).reshape(1, H)
    b_hh2 = b_hh.astype(f32).reshape(1, H)
    b_out2 = b_out.astype(f32).reshape(1, O)

    flops = 2 * B * T * (I * H + H * H + H * O)
    bytes_accessed = 4 * (B * T * I + H * I + H * H + 2 * H + O * H + O + B * T * O)
    cost = pl.CostEstimate(flops=flops, transcendentals=B * T * H,
                           bytes_accessed=bytes_accessed)

    def full(shape):
        return pl.BlockSpec(shape, lambda i, _n=len(shape): (0,) * _n)

    y2 = pl.pallas_call(
        functools.partial(_fused_rnn_kernel, seq_len=T),
        out_shape=jax.ShapeDtypeStruct((B * T, O), f32),
        grid=(1,),  # whole problem lives in one invocation, fully in VMEM
        in_specs=[
            full((B * T, I)),   # x
            full((H, I)),       # W_ih
            full((H, H)),       # W_hh
            full((1, H)),       # b_ih
            full((1, H)),       # b_hh
            full((O, H)),       # W_out
            full((1, O)),       # b_out
        ],
        out_specs=full((B * T, O)),
        scratch_shapes=[pltpu.VMEM((B * T, H), f32)],
        compiler_params=pltpu.CompilerParams(
            dimension_semantics=("arbitrary",)),
        cost_estimate=cost,
    )(x2, w_ih.astype(f32), w_hh.astype(f32), b_ih2, b_hh2,
      w_out.astype(f32), b_out2)

    return y2.reshape(B, T, O)


def rnn_reference(x_btc, w_ih, w_hh, b_ih, b_hh, w_out, b_out):
    """Pure-JAX reference of nn.RNN(batch_first=True, num_layers=1, tanh) + Linear."""
    B, T, I = x_btc.shape
    H = w_ih.shape[0]
    h0 = jnp.zeros((B, H), jnp.float32)

    def step(h, x_t):
        h_new = jnp.tanh(x_t @ w_ih.T + b_ih + h @ w_hh.T + b_hh)
        return h_new, h_new

    xs = jnp.transpose(x_btc, (1, 0, 2)).astype(jnp.float32)
    _, hs = jax.lax.scan(step, h0, xs)                 # (T, B, H)
    hidden = jnp.transpose(hs, (1, 0, 2))              # (B, T, H)
    return hidden @ w_out.T + b_out


if __name__ == "__main__":
    # Module config: in_channels=4, hidden_channels=32, out_channels=4, num_layers=1
    B, T, I, H, O = 2, 8, 4, 32, 4

    key = jax.random.PRNGKey(0)
    ks = jax.random.split(key, 8)

    # PyTorch-style uniform init: RNN params ~ U(-1/sqrt(H), 1/sqrt(H)),
    # Linear params ~ U(-1/sqrt(in_features)).
    s_rnn = 1.0 / jnp.sqrt(jnp.float32(H))
    s_lin = 1.0 / jnp.sqrt(jnp.float32(H))
    w_ih = jax.random.uniform(ks[0], (H, I), jnp.float32, -s_rnn, s_rnn)
    w_hh = jax.random.uniform(ks[1], (H, H), jnp.float32, -s_rnn, s_rnn)
    b_ih = jax.random.uniform(ks[2], (H,), jnp.float32, -s_rnn, s_rnn)
    b_hh = jax.random.uniform(ks[3], (H,), jnp.float32, -s_rnn, s_rnn)
    w_out = jax.random.uniform(ks[4], (O, H), jnp.float32, -s_lin, s_lin)
    b_out = jax.random.uniform(ks[5], (O,), jnp.float32, -s_lin, s_lin)

    x = jax.random.normal(ks[6], (B, T, I), jnp.float32)

    fwd = jax.jit(rnn_forward)
    out = fwd(x, w_ih, w_hh, b_ih, b_hh, w_out, b_out)
    out = jax.block_until_ready(out)

    ref = rnn_reference(x, w_ih, w_hh, b_ih, b_hh, w_out, b_out)
    assert out.shape == (B, T, O), out.shape
    assert jnp.allclose(out, ref, atol=1e-5, rtol=1e-5), float(jnp.abs(out - ref).max())

    print("KERNEL_OK")
</pallas_src>

<mosaic_0001>
module attributes {stable_mosaic.version = 11 : i64} {
  func.func @_fused_rnn_kernel(%arg0: i32, %arg1: memref<16x4xf32, #tpu.memory_space<vmem>>, %arg2: memref<32x4xf32, #tpu.memory_space<vmem>>, %arg3: memref<32x32xf32, #tpu.memory_space<vmem>>, %arg4: memref<1x32xf32, #tpu.memory_space<vmem>>, %arg5: memref<1x32xf32, #tpu.memory_space<vmem>>, %arg6: memref<4x32xf32, #tpu.memory_space<vmem>>, %arg7: memref<1x4xf32, #tpu.memory_space<vmem>>, %arg8: memref<16x4xf32, #tpu.memory_space<vmem>>, %arg9: memref<16x32xf32, #tpu.memory_space<vmem>>) attributes {dimension_semantics = [#tpu.dimension_semantics<arbitrary>], iteration_bounds = array<i64: 1>, scalar_prefetch = 0 : i64, scratch_operands = 1 : i64, tpu.core_type = #tpu.core_type<tc>, window_params = [{pipeline_mode = #tpu.pipeline_mode<synchronous>, transform_indices = @transform_0, window_bounds = array<i64: 16, 4>}, {pipeline_mode = #tpu.pipeline_mode<synchronous>, transform_indices = @transform_1, window_bounds = array<i64: 32, 4>}, {pipeline_mode = #tpu.pipeline_mode<synchronous>, transform_indices = @transform_2, window_bounds = array<i64: 32, 32>}, {pipeline_mode = #tpu.pipeline_mode<synchronous>, transform_indices = @transform_3, window_bounds = array<i64: 1, 32>}, {pipeline_mode = #tpu.pipeline_mode<synchronous>, transform_indices = @transform_4, window_bounds = array<i64: 1, 32>}, {pipeline_mode = #tpu.pipeline_mode<synchronous>, transform_indices = @transform_5, window_bounds = array<i64: 4, 32>}, {pipeline_mode = #tpu.pipeline_mode<synchronous>, transform_indices = @transform_6, window_bounds = array<i64: 1, 4>}, {pipeline_mode = #tpu.pipeline_mode<synchronous>, transform_indices = @transform_7, window_bounds = array<i64: 16, 4>}]} {
    %c0 = arith.constant 0 : index
    %c0_0 = arith.constant 0 : index
    %0 = vector.load %arg1[%c0, %c0_0] : memref<16x4xf32, #tpu.memory_space<vmem>>, vector<16x4xf32>
    %c0_1 = arith.constant 0 : index
    %c0_2 = arith.constant 0 : index
    %1 = vector.load %arg2[%c0_1, %c0_2] : memref<32x4xf32, #tpu.memory_space<vmem>>, vector<32x4xf32>
    %cst = arith.constant dense<0.000000e+00> : vector<16x32xf32>
    %2 = tpu.matmul %0, %1, %cst {dimension_numbers = #tpu.dot_dimension_numbers<[1], [1], [0], [0], [0, 0, 1, 0], [], []>} : vector<16x4xf32>, vector<32x4xf32>, vector<16x32xf32> -> vector<16x32xf32>
    %c0_3 = arith.constant 0 : index
    %c0_4 = arith.constant 0 : index
    %3 = vector.load %arg4[%c0_3, %c0_4] : memref<1x32xf32, #tpu.memory_space<vmem>>, vector<1x32xf32>
    %4 = vector.broadcast %3 : vector<1x32xf32> to vector<16x32xf32>
    %5 = arith.addf %2, %4 : vector<16x32xf32>
    %c0_5 = arith.constant 0 : index
    %c0_6 = arith.constant 0 : index
    %6 = vector.load %arg5[%c0_5, %c0_6] : memref<1x32xf32, #tpu.memory_space<vmem>>, vector<1x32xf32>
    %7 = vector.broadcast %6 : vector<1x32xf32> to vector<16x32xf32>
    %8 = arith.addf %5, %7 : vector<16x32xf32>
    %c0_7 = arith.constant 0 : index
    %c0_8 = arith.constant 0 : index
    %9 = vector.load %arg3[%c0_7, %c0_8] : memref<32x32xf32, #tpu.memory_space<vmem>>, vector<32x32xf32>
    %cst_9 = arith.constant 0.000000e+00 : f32
    %10 = vector.broadcast %cst_9 : f32 to vector<1x32xf32>
    %11 = vector.extract_strided_slice %8 {offsets = [0, 0], sizes = [1, 32], strides = [1, 1]} : vector<16x32xf32> to vector<1x32xf32>
    %cst_10 = arith.constant dense<0.000000e+00> : vector<1x32xf32>
    %12 = tpu.matmul %10, %9, %cst_10 {dimension_numbers = #tpu.dot_dimension_numbers<[1], [1], [0], [0], [0, 0, 1, 0], [], []>} : vector<1x32xf32>, vector<32x32xf32>, vector<1x32xf32> -> vector<1x32xf32>
    %13 = arith.addf %11, %12 : vector<1x32xf32>
    %14 = math.tanh %13 : vector<1x32xf32>
    %c0_11 = arith.constant 0 : index
    %c0_12 = arith.constant 0 : index
    %15 = vector.load %arg9[%c0_11, %c0_12] : memref<16x32xf32, #tpu.memory_space<vmem>>, vector<1x32xf32>
    tpu.vector_store %arg9[%c0_11, %c0_12], %14 {strides = array<i32>} : memref<16x32xf32, #tpu.memory_space<vmem>>, vector<1x32xf32>,
    %16 = vector.extract_strided_slice %8 {offsets = [1, 0], sizes = [1, 32], strides = [1, 1]} : vector<16x32xf32> to vector<1x32xf32>
    %cst_13 = arith.constant dense<0.000000e+00> : vector<1x32xf32>
    %17 = tpu.matmul %14, %9, %cst_13 {dimension_numbers = #tpu.dot_dimension_numbers<[1], [1], [0], [0], [0, 0, 1, 0], [], []>} : vector<1x32xf32>, vector<32x32xf32>, vector<1x32xf32> -> vector<1x32xf32>
    %18 = arith.addf %16, %17 : vector<1x32xf32>
    %19 = math.tanh %18 : vector<1x32xf32>
    %c1 = arith.constant 1 : index
    %c0_14 = arith.constant 0 : index
    %20 = vector.load %arg9[%c1, %c0_14] : memref<16x32xf32, #tpu.memory_space<vmem>>, vector<1x32xf32>
    tpu.vector_store %arg9[%c1, %c0_14], %19 {strides = array<i32>} : memref<16x32xf32, #tpu.memory_space<vmem>>, vector<1x32xf32>,
    %21 = vector.extract_strided_slice %8 {offsets = [2, 0], sizes = [1, 32], strides = [1, 1]} : vector<16x32xf32> to vector<1x32xf32>
    %cst_15 = arith.constant dense<0.000000e+00> : vector<1x32xf32>
    %22 = tpu.matmul %19, %9, %cst_15 {dimension_numbers = #tpu.dot_dimension_numbers<[1], [1], [0], [0], [0, 0, 1, 0], [], []>} : vector<1x32xf32>, vector<32x32xf32>, vector<1x32xf32> -> vector<1x32xf32>
    %23 = arith.addf %21, %22 : vector<1x32xf32>
    %24 = math.tanh %23 : vector<1x32xf32>
    %c2 = arith.constant 2 : index
    %c0_16 = arith.constant 0 : index
    %25 = vector.load %arg9[%c2, %c0_16] : memref<16x32xf32, #tpu.memory_space<vmem>>, vector<1x32xf32>
    tpu.vector_store %arg9[%c2, %c0_16], %24 {strides = array<i32>} : memref<16x32xf32, #tpu.memory_space<vmem>>, vector<1x32xf32>,
    %26 = vector.extract_strided_slice %8 {offsets = [3, 0], sizes = [1, 32], strides = [1, 1]} : vector<16x32xf32> to vector<1x32xf32>
    %cst_17 = arith.constant dense<0.000000e+00> : vector<1x32xf32>
    %27 = tpu.matmul %24, %9, %cst_17 {dimension_numbers = #tpu.dot_dimension_numbers<[1], [1], [0], [0], [0, 0, 1, 0], [], []>} : vector<1x32xf32>, vector<32x32xf32>, vector<1x32xf32> -> vector<1x32xf32>
    %28 = arith.addf %26, %27 : vector<1x32xf32>
    %29 = math.tanh %28 : vector<1x32xf32>
    %c3 = arith.constant 3 : index
    %c0_18 = arith.constant 0 : index
    %30 = vector.load %arg9[%c3, %c0_18] : memref<16x32xf32, #tpu.memory_space<vmem>>, vector<1x32xf32>
    tpu.vector_store %arg9[%c3, %c0_18], %29 {strides = array<i32>} : memref<16x32xf32, #tpu.memory_space<vmem>>, vector<1x32xf32>,
    %31 = vector.extract_strided_slice %8 {offsets = [4, 0], sizes = [1, 32], strides = [1, 1]} : vector<16x32xf32> to vector<1x32xf32>
    %cst_19 = arith.constant dense<0.000000e+00> : vector<1x32xf32>
    %32 = tpu.matmul %29, %9, %cst_19 {dimension_numbers = #tpu.dot_dimension_numbers<[1], [1], [0], [0], [0, 0, 1, 0], [], []>} : vector<1x32xf32>, vector<32x32xf32>, vector<1x32xf32> -> vector<1x32xf32>
    %33 = arith.addf %31, %32 : vector<1x32xf32>
    %34 = math.tanh %33 : vector<1x32xf32>
    %c4 = arith.constant 4 : index
    %c0_20 = arith.constant 0 : index
    %35 = vector.load %arg9[%c4, %c0_20] : memref<16x32xf32, #tpu.memory_space<vmem>>, vector<1x32xf32>
    tpu.vector_store %arg9[%c4, %c0_20], %34 {strides = array<i32>} : memref<16x32xf32, #tpu.memory_space<vmem>>, vector<1x32xf32>,
    %36 = vector.extract_strided_slice %8 {offsets = [5, 0], sizes = [1, 32], strides = [1, 1]} : vector<16x32xf32> to vector<1x32xf32>
    %cst_21 = arith.constant dense<0.000000e+00> : vector<1x32xf32>
    %37 = tpu.matmul %34, %9, %cst_21 {dimension_numbers = #tpu.dot_dimension_numbers<[1], [1], [0], [0], [0, 0, 1, 0], [], []>} : vector<1x32xf32>, vector<32x32xf32>, vector<1x32xf32> -> vector<1x32xf32>
    %38 = arith.addf %36, %37 : vector<1x32xf32>
    %39 = math.tanh %38 : vector<1x32xf32>
    %c5 = arith.constant 5 : index
    %c0_22 = arith.constant 0 : index
    %40 = vector.load %arg9[%c5, %c0_22] : memref<16x32xf32, #tpu.memory_space<vmem>>, vector<1x32xf32>
    tpu.vector_store %arg9[%c5, %c0_22], %39 {strides = array<i32>} : memref<16x32xf32, #tpu.memory_space<vmem>>, vector<1x32xf32>,
    %41 = vector.extract_strided_slice %8 {offsets = [6, 0], sizes = [1, 32], strides = [1, 1]} : vector<16x32xf32> to vector<1x32xf32>
    %cst_23 = arith.constant dense<0.000000e+00> : vector<1x32xf32>
    %42 = tpu.matmul %39, %9, %cst_23 {dimension_numbers = #tpu.dot_dimension_numbers<[1], [1], [0], [0], [0, 0, 1, 0], [], []>} : vector<1x32xf32>, vector<32x32xf32>, vector<1x32xf32> -> vector<1x32xf32>
    %43 = arith.addf %41, %42 : vector<1x32xf32>
    %44 = math.tanh %43 : vector<1x32xf32>
    %c6 = arith.constant 6 : index
    %c0_24 = arith.constant 0 : index
    %45 = vector.load %arg9[%c6, %c0_24] : memref<16x32xf32, #tpu.memory_space<vmem>>, vector<1x32xf32>
    tpu.vector_store %arg9[%c6, %c0_24], %44 {strides = array<i32>} : memref<16x32xf32, #tpu.memory_space<vmem>>, vector<1x32xf32>,
    %46 = vector.extract_strided_slice %8 {offsets = [7, 0], sizes = [1, 32], strides = [1, 1]} : vector<16x32xf32> to vector<1x32xf32>
    %cst_25 = arith.constant dense<0.000000e+00> : vector<1x32xf32>
    %47 = tpu.matmul %44, %9, %cst_25 {dimension_numbers = #tpu.dot_dimension_numbers<[1], [1], [0], [0], [0, 0, 1, 0], [], []>} : vector<1x32xf32>, vector<32x32xf32>, vector<1x32xf32> -> vector<1x32xf32>
    %48 = arith.addf %46, %47 : vector<1x32xf32>
    %49 = math.tanh %48 : vector<1x32xf32>
    %c7 = arith.constant 7 : index
    %c0_26 = arith.constant 0 : index
    %50 = vector.load %arg9[%c7, %c0_26] : memref<16x32xf32, #tpu.memory_space<vmem>>, vector<1x32xf32>
    tpu.vector_store %arg9[%c7, %c0_26], %49 {strides = array<i32>} : memref<16x32xf32, #tpu.memory_space<vmem>>, vector<1x32xf32>,
    %cst_27 = arith.constant 0.000000e+00 : f32
    %51 = vector.broadcast %cst_27 : f32 to vector<1x32xf32>
    %52 = vector.extract_strided_slice %8 {offsets = [8, 0], sizes = [1, 32], strides = [1, 1]} : vector<16x32xf32> to vector<1x32xf32>
    %cst_28 = arith.constant dense<0.000000e+00> : vector<1x32xf32>
    %53 = tpu.matmul %51, %9, %cst_28 {dimension_numbers = #tpu.dot_dimension_numbers<[1], [1], [0], [0], [0, 0, 1, 0], [], []>} : vector<1x32xf32>, vector<32x32xf32>, vector<1x32xf32> -> vector<1x32xf32>
    %54 = arith.addf %52, %53 : vector<1x32xf32>
    %55 = math.tanh %54 : vector<1x32xf32>
    %c8 = arith.constant 8 : index
    %c0_29 = arith.constant 0 : index
    %56 = vector.load %arg9[%c8, %c0_29] : memref<16x32xf32, #tpu.memory_space<vmem>>, vector<1x32xf32>
    tpu.vector_store %arg9[%c8, %c0_29], %55 {strides = array<i32>} : memref<16x32xf32, #tpu.memory_space<vmem>>, vector<1x32xf32>,
    %57 = vector.extract_strided_slice %8 {offsets = [9, 0], sizes = [1, 32], strides = [1, 1]} : vector<16x32xf32> to vector<1x32xf32>
    %cst_30 = arith.constant dense<0.000000e+00> : vector<1x32xf32>
    %58 = tpu.matmul %55, %9, %cst_30 {dimension_numbers = #tpu.dot_dimension_numbers<[1], [1], [0], [0], [0, 0, 1, 0], [], []>} : vector<1x32xf32>, vector<32x32xf32>, vector<1x32xf32> -> vector<1x32xf32>
    %59 = arith.addf %57, %58 : vector<1x32xf32>
    %60 = math.tanh %59 : vector<1x32xf32>
    %c9 = arith.constant 9 : index
    %c0_31 = arith.constant 0 : index
    %61 = vector.load %arg9[%c9, %c0_31] : memref<16x32xf32, #tpu.memory_space<vmem>>, vector<1x32xf32>
    tpu.vector_store %arg9[%c9, %c0_31], %60 {strides = array<i32>} : memref<16x32xf32, #tpu.memory_space<vmem>>, vector<1x32xf32>,
    %62 = vector.extract_strided_slice %8 {offsets = [10, 0], sizes = [1, 32], strides = [1, 1]} : vector<16x32xf32> to vector<1x32xf32>
    %cst_32 = arith.constant dense<0.000000e+00> : vector<1x32xf32>
    %63 = tpu.matmul %60, %9, %cst_32 {dimension_numbers = #tpu.dot_dimension_numbers<[1], [1], [0], [0], [0, 0, 1, 0], [], []>} : vector<1x32xf32>, vector<32x32xf32>, vector<1x32xf32> -> vector<1x32xf32>
    %64 = arith.addf %62, %63 : vector<1x32xf32>
    %65 = math.tanh %64 : vector<1x32xf32>
    %c10 = arith.constant 10 : index
    %c0_33 = arith.constant 0 : index
    %66 = vector.load %arg9[%c10, %c0_33] : memref<16x32xf32, #tpu.memory_space<vmem>>, vector<1x32xf32>
    tpu.vector_store %arg9[%c10, %c0_33], %65 {strides = array<i32>} : memref<16x32xf32, #tpu.memory_space<vmem>>, vector<1x32xf32>,
    %67 = vector.extract_strided_slice %8 {offsets = [11, 0], sizes = [1, 32], strides = [1, 1]} : vector<16x32xf32> to vector<1x32xf32>
    %cst_34 = arith.constant dense<0.000000e+00> : vector<1x32xf32>
    %68 = tpu.matmul %65, %9, %cst_34 {dimension_numbers = #tpu.dot_dimension_numbers<[1], [1], [0], [0], [0, 0, 1, 0], [], []>} : vector<1x32xf32>, vector<32x32xf32>, vector<1x32xf32> -> vector<1x32xf32>
    %69 = arith.addf %67, %68 : vector<1x32xf32>
    %70 = math.tanh %69 : vector<1x32xf32>
    %c11 = arith.constant 11 : index
    %c0_35 = arith.constant 0 : index
    %71 = vector.load %arg9[%c11, %c0_35] : memref<16x32xf32, #tpu.memory_space<vmem>>, vector<1x32xf32>
    tpu.vector_store %arg9[%c11, %c0_35], %70 {strides = array<i32>} : memref<16x32xf32, #tpu.memory_space<vmem>>, vector<1x32xf32>,
    %72 = vector.extract_strided_slice %8 {offsets = [12, 0], sizes = [1, 32], strides = [1, 1]} : vector<16x32xf32> to vector<1x32xf32>
    %cst_36 = arith.constant dense<0.000000e+00> : vector<1x32xf32>
    %73 = tpu.matmul %70, %9, %cst_36 {dimension_numbers = #tpu.dot_dimension_numbers<[1], [1], [0], [0], [0, 0, 1, 0], [], []>} : vector<1x32xf32>, vector<32x32xf32>, vector<1x32xf32> -> vector<1x32xf32>
    %74 = arith.addf %72, %73 : vector<1x32xf32>
    %75 = math.tanh %74 : vector<1x32xf32>
    %c12 = arith.constant 12 : index
    %c0_37 = arith.constant 0 : index
    %76 = vector.load %arg9[%c12, %c0_37] : memref<16x32xf32, #tpu.memory_space<vmem>>, vector<1x32xf32>
    tpu.vector_store %arg9[%c12, %c0_37], %75 {strides = array<i32>} : memref<16x32xf32, #tpu.memory_space<vmem>>, vector<1x32xf32>,
    %77 = vector.extract_strided_slice %8 {offsets = [13, 0], sizes = [1, 32], strides = [1, 1]} : vector<16x32xf32> to vector<1x32xf32>
    %cst_38 = arith.constant dense<0.000000e+00> : vector<1x32xf32>
    %78 = tpu.matmul %75, %9, %cst_38 {dimension_numbers = #tpu.dot_dimension_numbers<[1], [1], [0], [0], [0, 0, 1, 0], [], []>} : vector<1x32xf32>, vector<32x32xf32>, vector<1x32xf32> -> vector<1x32xf32>
    %79 = arith.addf %77, %78 : vector<1x32xf32>
    %80 = math.tanh %79 : vector<1x32xf32>
    %c13 = arith.constant 13 : index
    %c0_39 = arith.constant 0 : index
    %81 = vector.load %arg9[%c13, %c0_39] : memref<16x32xf32, #tpu.memory_space<vmem>>, vector<1x32xf32>
    tpu.vector_store %arg9[%c13, %c0_39], %80 {strides = array<i32>} : memref<16x32xf32, #tpu.memory_space<vmem>>, vector<1x32xf32>,
    %82 = vector.extract_strided_slice %8 {offsets = [14, 0], sizes = [1, 32], strides = [1, 1]} : vector<16x32xf32> to vector<1x32xf32>
    %cst_40 = arith.constant dense<0.000000e+00> : vector<1x32xf32>
    %83 = tpu.matmul %80, %9, %cst_40 {dimension_numbers = #tpu.dot_dimension_numbers<[1], [1], [0], [0], [0, 0, 1, 0], [], []>} : vector<1x32xf32>, vector<32x32xf32>, vector<1x32xf32> -> vector<1x32xf32>
    %84 = arith.addf %82, %83 : vector<1x32xf32>
    %85 = math.tanh %84 : vector<1x32xf32>
    %c14 = arith.constant 14 : index
    %c0_41 = arith.constant 0 : index
    %86 = vector.load %arg9[%c14, %c0_41] : memref<16x32xf32, #tpu.memory_space<vmem>>, vector<1x32xf32>
    tpu.vector_store %arg9[%c14, %c0_41], %85 {strides = array<i32>} : memref<16x32xf32, #tpu.memory_space<vmem>>, vector<1x32xf32>,
    %87 = vector.extract_strided_slice %8 {offsets = [15, 0], sizes = [1, 32], strides = [1, 1]} : vector<16x32xf32> to vector<1x32xf32>
    %cst_42 = arith.constant dense<0.000000e+00> : vector<1x32xf32>
    %88 = tpu.matmul %85, %9, %cst_42 {dimension_numbers = #tpu.dot_dimension_numbers<[1], [1], [0], [0], [0, 0, 1, 0], [], []>} : vector<1x32xf32>, vector<32x32xf32>, vector<1x32xf32> -> vector<1x32xf32>
    %89 = arith.addf %87, %88 : vector<1x32xf32>
    %90 = math.tanh %89 : vector<1x32xf32>
    %c15 = arith.constant 15 : index
    %c0_43 = arith.constant 0 : index
    %91 = vector.load %arg9[%c15, %c0_43] : memref<16x32xf32, #tpu.memory_space<vmem>>, vector<1x32xf32>
    tpu.vector_store %arg9[%c15, %c0_43], %90 {strides = array<i32>} : memref<16x32xf32, #tpu.memory_space<vmem>>, vector<1x32xf32>,
    %c0_44 = arith.constant 0 : index
    %c0_45 = arith.constant 0 : index
    %92 = vector.load %arg9[%c0_44, %c0_45] : memref<16x32xf32, #tpu.memory_space<vmem>>, vector<16x32xf32>
    %c0_46 = arith.constant 0 : index
    %c0_47 = arith.constant 0 : index
    %93 = vector.load %arg6[%c0_46, %c0_47] : memref<4x32xf32, #tpu.memory_space<vmem>>, vector<4x32xf32>
    %cst_48 = arith.constant dense<0.000000e+00> : vector<16x4xf32>
    %94 = tpu.matmul %92, %93, %cst_48 {dimension_numbers = #tpu.dot_dimension_numbers<[1], [1], [0], [0], [0, 0, 1, 0], [], []>} : vector<16x32xf32>, vector<4x32xf32>, vector<16x4xf32> -> vector<16x4xf32>
    %c0_49 = arith.constant 0 : index
    %c0_50 = arith.constant 0 : index
    %95 = vector.load %arg7[%c0_49, %c0_50] : memref<1x4xf32, #tpu.memory_space<vmem>>, vector<1x4xf32>
    %96 = vector.broadcast %95 : vector<1x4xf32> to vector<16x4xf32>
    %97 = arith.addf %94, %96 : vector<16x4xf32>
    %c0_51 = arith.constant 0 : index
    %c0_52 = arith.constant 0 : index
    %98 = vector.load %arg8[%c0_51, %c0_52] : memref<16x4xf32, #tpu.memory_space<vmem>>, vector<16x4xf32>
    tpu.vector_store %arg8[%c0_51, %c0_52], %97 {strides = array<i32>} : memref<16x4xf32, #tpu.memory_space<vmem>>, vector<16x4xf32>,
    return
  }
  func.func @transform_0(%arg0: i32) -> (i32, i32) {
    %c0_i32 = arith.constant 0 : i32
    %c0_i32_0 = arith.constant 0 : i32
    %c0_i32_1 = arith.constant 0 : i32
    return %c0_i32, %c0_i32_0 : i32, i32
  }
  func.func @transform_1(%arg0: i32) -> (i32, i32) {
    %c0_i32 = arith.constant 0 : i32
    %c0_i32_0 = arith.constant 0 : i32
    %c0_i32_1 = arith.constant 0 : i32
    return %c0_i32, %c0_i32_0 : i32, i32
  }
  func.func @transform_2(%arg0: i32) -> (i32, i32) {
    %c0_i32 = arith.constant 0 : i32
    %c0_i32_0 = arith.constant 0 : i32
    %c0_i32_1 = arith.constant 0 : i32
    return %c0_i32, %c0_i32_0 : i32, i32
  }
  func.func @transform_3(%arg0: i32) -> (i32, i32) {
    %c0_i32 = arith.constant 0 : i32
    %c0_i32_0 = arith.constant 0 : i32
    %c0_i32_1 = arith.constant 0 : i32
    return %c0_i32, %c0_i32_0 : i32, i32
  }
  func.func @transform_4(%arg0: i32) -> (i32, i32) {
    %c0_i32 = arith.constant 0 : i32
    %c0_i32_0 = arith.constant 0 : i32
    %c0_i32_1 = arith.constant 0 : i32
    return %c0_i32, %c0_i32_0 : i32, i32
  }
  func.func @transform_5(%arg0: i32) -> (i32, i32) {
    %c0_i32 = arith.constant 0 : i32
    %c0_i32_0 = arith.constant 0 : i32
    %c0_i32_1 = arith.constant 0 : i32
    return %c0_i32, %c0_i32_0 : i32, i32
  }
  func.func @transform_6(%arg0: i32) -> (i32, i32) {
    %c0_i32 = arith.constant 0 : i32
    %c0_i32_0 = arith.constant 0 : i32
    %c0_i32_1 = arith.constant 0 : i32
    return %c0_i32, %c0_i32_0 : i32, i32
  }
  func.func @transform_7(%arg0: i32) -> (i32, i32) {
    %c0_i32 = arith.constant 0 : i32
    %c0_i32_0 = arith.constant 0 : i32
    %c0_i32_1 = arith.constant 0 : i32
    return %c0_i32, %c0_i32_0 : i32, i32
  }
}

</mosaic_0001>

<llo_original>
// kernel: rnn_forward.1
$region0: #{rnn_forward.1}
  #allocation0 [shape = 'u32[]', space=smem, size = 0x4, offset = 0x4, fixed_abs, tag = 'smem constant byte address 0x4 - core index']
  #allocation1 [shape = 'u32[144,128]{1,0:T(1,128)}', space=vmem, size = 0x12000, scoped, tag = 'internal scratch']
  #allocation2 [shape = 'f32[16,32]{1,0:T(8,128)}', space=vmem, size = 0x2000, scoped, tag = 'scratch operand']
  %s0 = inlined_call_operand.vmem [shape: f32[16,4], index: 0, kind: input, shape index: {}]
  %s1 = inlined_call_operand.vmem [shape: f32[32,4], index: 1, kind: input, shape index: {}]
  %s2 = inlined_call_operand.vmem [shape: f32[32,32], index: 2, kind: input, shape index: {}]
  %s3 = inlined_call_operand.vmem [shape: f32[1,32], index: 3, kind: input, shape index: {}]
  %s4 = inlined_call_operand.vmem [shape: f32[1,32], index: 4, kind: input, shape index: {}]
  %s5 = inlined_call_operand.vmem [shape: f32[4,32], index: 5, kind: input, shape index: {}]
  %s6 = inlined_call_operand.vmem [shape: f32[1,4], index: 6, kind: input, shape index: {}]
  %s7 = inlined_call_operand.vmem [shape: f32[16,4], index: 7, kind: output, shape index: {}]
  %s8 = sld [smem:[#allocation0]]
  $region38: #{rnn_forward.1} parent=0
    _
  %s10 = ssub.s32 1, %s8
  %s11 = scalar_select 0, %s10, %s8
  // Predicated region
  $region2: #{rnn_forward.1} parent=0 // pred_check
    _
  $region3: #{rnn_forward.1} parent=0 // pred_check_branch
    %13 = sbr.rel (0) target = $region5
  $region4: #{rnn_forward.1} parent=0 // pred_region
    _
  $region5: #{rnn_forward.1} parent=0 // pred_fallthru
    _
  // Predicated region
  $region6: #{rnn_forward.1} parent=0 // pred_check
    _
  $region7: #{rnn_forward.1} parent=0 // pred_check_branch
    %15 = sbr.rel (0) target = $region9
  $region8: #{rnn_forward.1} parent=0 // pred_region
    _
  $region9: #{rnn_forward.1} parent=0 // pred_fallthru
    _
  // Predicated region
  $region10: #{rnn_forward.1} parent=0 // pred_check
    _
  $region11: #{rnn_forward.1} parent=0 // pred_check_branch
    %17 = sbr.rel (0) target = $region13
  $region12: #{rnn_forward.1} parent=0 // pred_region
    _
  $region13: #{rnn_forward.1} parent=0 // pred_fallthru
    _
  // Predicated region
  $region14: #{rnn_forward.1} parent=0 // pred_check
    _
  $region15: #{rnn_forward.1} parent=0 // pred_check_branch
    %19 = sbr.rel (0) target = $region17
  $region16: #{rnn_forward.1} parent=0 // pred_region
    _
  $region17: #{rnn_forward.1} parent=0 // pred_fallthru
    _
  // Predicated region
  $region18: #{rnn_forward.1} parent=0 // pred_check
    _
  $region19: #{rnn_forward.1} parent=0 // pred_check_branch
    %21 = sbr.rel (0) target = $region21
  $region20: #{rnn_forward.1} parent=0 // pred_region
    _
  $region21: #{rnn_forward.1} parent=0 // pred_fallthru
    _
  // Predicated region
  $region22: #{rnn_forward.1} parent=0 // pred_check
    _
  $region23: #{rnn_forward.1} parent=0 // pred_check_branch
    %23 = sbr.rel (0) target = $region25
  $region24: #{rnn_forward.1} parent=0 // pred_region
    _
  $region25: #{rnn_forward.1} parent=0 // pred_fallthru
    _
  // Predicated region
  $region26: #{rnn_forward.1} parent=0 // pred_check
    _
  $region27: #{rnn_forward.1} parent=0 // pred_check_branch
    %25 = sbr.rel (0) target = $region29
  $region28: #{rnn_forward.1} parent=0 // pred_region
    _
  $region29: #{rnn_forward.1} parent=0 // pred_fallthru
    _
  %v26 = vld [vmem:[%s0] sm:$0xff]
  %v27 = vld [vmem:[%s0 + $0x8] sm:$0xff]
  %v28 = vld [vmem:[%s1] sm:$0xff]
  %v29 = vld [vmem:[%s1 + $0x8] sm:$0xff]
  %v30 = vld [vmem:[%s1 + $0x10] sm:$0xff]
  %v31 = vld [vmem:[%s1 + $0x18] sm:$0xff]
  %v32 = vld [vmem:[%s3] sm:$0x1]
  %v34 = vlaneseq
  %v35 = vshrl.u32 %v34, 7
  %v36 = vsub.s32 0, %v35
  %v37 = vrot.slane %v32, %v36
  %vm39 = vcmask 31744
  %v41 = vsel %vm39, %v26, 0
  %v44 = vsel %vm39, %v27, 0
  %v47 = vsel %vm39, %v28, 0
  %v50 = vsel %vm39, %v29, 0
  %v53 = vsel %vm39, %v30, 0
  %v56 = vsel %vm39, %v31, 0
  %58 = vmatprep.subr.mxu0 0.0
  %59 = vmatpush1.xpose.msra.mxu0 0.0
  %60 = vmatprep.subr.mxu0 0.0
  %61 = vmatpush1.xpose.msra.mxu0 0.0
  %62 = vmatprep.subr.mxu0 0.0
  %63 = vmatpush1.xpose.msra.mxu0 0.0
  %64 = vmatprep.subr.mxu0 0.0
  %65 = vmatpush1.xpose.msra.mxu0 0.0
  %66 = vmatprep.subr.mxu0 0.0
  %67 = vmatpush1.xpose.msra.mxu0 0.0
  %68 = vmatprep.subr.mxu0 0.0
  %69 = vmatpush1.xpose.msra.mxu0 0.0
  %70 = vmatprep.subr.mxu0 0.0
  %71 = vmatpush1.xpose.msra.mxu0 0.0
  %72 = vmatprep.subr.mxu0 0.0
  %73 = vmatpush1.xpose.msra.mxu0 0.0
  %74 = vmatprep.subr.mxu0 0.0
  %75 = vmatpush1.xpose.msra.mxu0 0.0
  %76 = vmatprep.subr.mxu0 0.0
  %77 = vmatpush1.xpose.msra.mxu0 0.0
  %78 = vmatprep.subr.mxu0 0.0
  %79 = vmatpush1.xpose.msra.mxu0 0.0
  %80 = vmatprep.subr.mxu0 0.0
  %81 = vmatpush1.xpose.msra.mxu0 0.0
  %82 = vmatprep.subr.mxu0 0.0
  %83 = vmatpush1.xpose.msra.mxu0 %v56
  %84 = vmatprep.subr.mxu0 0.0
  %85 = vmatpush1.xpose.msra.mxu0 %v53
  %86 = vmatprep.subr.mxu0 0.0
  %87 = vmatpush1.xpose.msra.mxu0 %v50
  %88 = vmatprep.subr.mxu0 0.0
  %89 = vmatpush1.xpose.msra.mxu0 %v47
  %90 = vmatprep.subr.mxu0 0.0
  %91 = vmatpush2.xpose.msra.mxu0 0.0
  %92 = vmatprep.subr.mxu0 0.0
  %93 = vmatpush2.xpose.msra.mxu0 0.0
  %94 = vmatprep.subr.mxu0 0.0
  %95 = vmatpush2.xpose.msra.mxu0 0.0
  %96 = vmatprep.subr.mxu0 0.0
  %97 = vmatpush2.xpose.msra.mxu0 0.0
  %98 = vmatprep.subr.mxu0 0.0
  %99 = vmatpush2.xpose.msra.mxu0 0.0
  %100 = vmatprep.subr.mxu0 0.0
  %101 = vmatpush2.xpose.msra.mxu0 0.0
  %102 = vmatprep.subr.mxu0 0.0
  %103 = vmatpush2.xpose.msra.mxu0 0.0
  %104 = vmatprep.subr.mxu0 0.0
  %105 = vmatpush2.xpose.msra.mxu0 0.0
  %106 = vmatprep.subr.mxu0 0.0
  %107 = vmatpush2.xpose.msra.mxu0 0.0
  %108 = vmatprep.subr.mxu0 0.0
  %109 = vmatpush2.xpose.msra.mxu0 0.0
  %110 = vmatprep.subr.mxu0 0.0
  %111 = vmatpush2.xpose.msra.mxu0 0.0
  %112 = vmatprep.subr.mxu0 0.0
  %113 = vmatpush2.xpose.msra.mxu0 0.0
  %114 = vmatprep.subr.mxu0 0.0
  %115 = vmatpush2.xpose.msra.mxu0 0.0
  %116 = vmatprep.subr.mxu0 0.0
  %117 = vmatpush2.xpose.msra.mxu0 0.0
  %118 = vmatprep.subr.mxu0 0.0
  %119 = vmatpush2.xpose.msra.mxu0 0.0
  %120 = vmatprep.subr.mxu0 0.0
  %121 = vmatpush2.xpose.msra.mxu0 0.0
  %122 = vmatprep.mubr.f32.mxu0 0.0
  %123 = vmatmul.mubr.f32.gmra.mxu0 %v41
  %v124 = vpop.f32.mrf.mxu0
  %v125 = vadd.f32 %v37, %v124
  %v126 = vpop.f32.mrf.mxu0
  %127 = vmatprep.mubr.f32.mxu0 0.0
  %128 = vmatmul.mubr.f32.gmra.mxu0 %v44
  %v129 = vpop.f32.mrf.mxu0
  %v130 = vadd.f32 %v37, %v129
  %v131 = vpop.f32.mrf.mxu0
  %132 = vdwg.mxu0
  %v133 = vld [vmem:[%s4] sm:$0x1]
  %v135 = vlaneseq
  %v136 = vshrl.u32 %v135, 7
  %v137 = vsub.s32 0, %v136
  %v138 = vrot.slane %v133, %v137
  %v140 = vadd.f32 %v125, %v138
  %v141 = vadd.f32 %v130, %v138
  %v142 = vld [vmem:[%s2] sm:$0xff]
  %v143 = vld [vmem:[%s2 + $0x8] sm:$0xff]
  %v144 = vld [vmem:[%s2 + $0x10] sm:$0xff]
  %v145 = vld [vmem:[%s2 + $0x18] sm:$0xff]
  %vm146 = vcmask 261120
  %v148 = vsel %vm146, 0.0, 0
  %v151 = vsel %vm146, %v142, 0
  %v154 = vsel %vm146, %v143, 0
  %v157 = vsel %vm146, %v144, 0
  %v160 = vsel %vm146, %v145, 0
  %162 = vmatprep.subr.mxu0 0.0
  %163 = vmatpush1.xpose.msra.mxu0 0.0
  %164 = vmatprep.subr.mxu0 0.0
  %165 = vmatpush1.xpose.msra.mxu0 0.0
  %166 = vmatprep.subr.mxu0 0.0
  %167 = vmatpush1.xpose.msra.mxu0 0.0
  %168 = vmatprep.subr.mxu0 0.0
  %169 = vmatpush1.xpose.msra.mxu0 0.0
  %170 = vmatprep.subr.mxu0 0.0
  %171 = vmatpush1.xpose.msra.mxu0 0.0
  %172 = vmatprep.subr.mxu0 0.0
  %173 = vmatpush1.xpose.msra.mxu0 0.0
  %174 = vmatprep.subr.mxu0 0.0
  %175 = vmatpush1.xpose.msra.mxu0 0.0
  %176 = vmatprep.subr.mxu0 0.0
  %177 = vmatpush1.xpose.msra.mxu0 0.0
  %178 = vmatprep.subr.mxu0 0.0
  %179 = vmatpush1.xpose.msra.mxu0 0.0
  %180 = vmatprep.subr.mxu0 0.0
  %181 = vmatpush1.xpose.msra.mxu0 0.0
  %182 = vmatprep.subr.mxu0 0.0
  %183 = vmatpush1.xpose.msra.mxu0 0.0
  %184 = vmatprep.subr.mxu0 0.0
  %185 = vmatpush1.xpose.msra.mxu0 0.0
  %186 = vmatprep.subr.mxu0 0.0
  %187 = vmatpush1.xpose.msra.mxu0 %v160
  %188 = vmatprep.subr.mxu0 0.0
  %189 = vmatpush1.xpose.msra.mxu0 %v157
  %190 = vmatprep.subr.mxu0 0.0
  %191 = vmatpush1.xpose.msra.mxu0 %v154
  %192 = vmatprep.subr.mxu0 0.0
  %193 = vmatpush1.xpose.msra.mxu0 %v151
  %194 = vmatprep.subr.mxu0 0.0
  %195 = vmatpush2.xpose.msra.mxu0 0.0
  %196 = vmatprep.subr.mxu0 0.0
  %197 = vmatpush2.xpose.msra.mxu0 0.0
  %198 = vmatprep.subr.mxu0 0.0
  %199 = vmatpush2.xpose.msra.mxu0 0.0
  %200 = vmatprep.subr.mxu0 0.0
  %201 = vmatpush2.xpose.msra.mxu0 0.0
  %202 = vmatprep.subr.mxu0 0.0
  %203 = vmatpush2.xpose.msra.mxu0 0.0
  %204 = vmatprep.subr.mxu0 0.0
  %205 = vmatpush2.xpose.msra.mxu0 0.0
  %206 = vmatprep.subr.mxu0 0.0
  %207 = vmatpush2.xpose.msra.mxu0 0.0
  %208 = vmatprep.subr.mxu0 0.0
  %209 = vmatpush2.xpose.msra.mxu0 0.0
  %210 = vmatprep.subr.mxu0 0.0
  %211 = vmatpush2.xpose.msra.mxu0 0.0
  %212 = vmatprep.subr.mxu0 0.0
  %213 = vmatpush2.xpose.msra.mxu0 0.0
  %214 = vmatprep.subr.mxu0 0.0
  %215 = vmatpush2.xpose.msra.mxu0 0.0
  %216 = vmatprep.subr.mxu0 0.0
  %217 = vmatpush2.xpose.msra.mxu0 0.0
  %218 = vmatprep.subr.mxu0 0.0
  %219 = vmatpush2.xpose.msra.mxu0 0.0
  %220 = vmatprep.subr.mxu0 0.0
  %221 = vmatpush2.xpose.msra.mxu0 0.0
  %222 = vmatprep.subr.mxu0 0.0
  %223 = vmatpush2.xpose.msra.mxu0 0.0
  %224 = vmatprep.subr.mxu0 0.0
  %225 = vmatpush2.xpose.msra.mxu0 0.0
  %226 = vmatprep.mubr.f32.mxu0 0.0
  %227 = vmatmul.mubr.f32.gmra.mxu0 %v148
  %v228 = vpop.f32.mrf.mxu0
  %v229 = vadd.f32 0.0, %v228
  %v230 = vpop.f32.mrf.mxu0
  %231 = vdwg.mxu0
  %v232 = vadd.f32 %v140, %v229
  %v233 = vtanh.pop %v232
  %vm234 = vcmask 253952
  %235 = vst.msk [vmem:[#allocation2] sm:$0x1] %vm234, %v233
  %v237 = vsel %vm146, %v233, 0
  %239 = vmatprep.subr.mxu0 0.0
  %240 = vmatpush1.xpose.msra.mxu0 0.0
  %241 = vmatprep.subr.mxu0 0.0
  %242 = vmatpush1.xpose.msra.mxu0 0.0
  %243 = vmatprep.subr.mxu0 0.0
  %244 = vmatpush1.xpose.msra.mxu0 0.0
  %245 = vmatprep.subr.mxu0 0.0
  %246 = vmatpush1.xpose.msra.mxu0 0.0
  %247 = vmatprep.subr.mxu0 0.0
  %248 = vmatpush1.xpose.msra.mxu0 0.0
  %249 = vmatprep.subr.mxu0 0.0
  %250 = vmatpush1.xpose.msra.mxu0 0.0
  %251 = vmatprep.subr.mxu0 0.0
  %252 = vmatpush1.xpose.msra.mxu0 0.0
  %253 = vmatprep.subr.mxu0 0.0
  %254 = vmatpush1.xpose.msra.mxu0 0.0
  %255 = vmatprep.subr.mxu0 0.0
  %256 = vmatpush1.xpose.msra.mxu0 0.0
  %257 = vmatprep.subr.mxu0 0.0
  %258 = vmatpush1.xpose.msra.mxu0 0.0
  %259 = vmatprep.subr.mxu0 0.0
  %260 = vmatpush1.xpose.msra.mxu0 0.0
  %261 = vmatprep.subr.mxu0 0.0
  %262 = vmatpush1.xpose.msra.mxu0 0.0
  %263 = vmatprep.subr.mxu0 0.0
  %264 = vmatpush1.xpose.msra.mxu0 %v160
  %265 = vmatprep.subr.mxu0 0.0
  %266 = vmatpush1.xpose.msra.mxu0 %v157
  %267 = vmatprep.subr.mxu0 0.0
  %268 = vmatpush1.xpose.msra.mxu0 %v154
  %269 = vmatprep.subr.mxu0 0.0
  %270 = vmatpush1.xpose.msra.mxu0 %v151
  %271 = vmatprep.subr.mxu0 0.0
  %272 = vmatpush2.xpose.msra.mxu0 0.0
  %273 = vmatprep.subr.mxu0 0.0
  %274 = vmatpush2.xpose.msra.mxu0 0.0
  %275 = vmatprep.subr.mxu0 0.0
  %276 = vmatpush2.xpose.msra.mxu0 0.0
  %277 = vmatprep.subr.mxu0 0.0
  %278 = vmatpush2.xpose.msra.mxu0 0.0
  %279 = vmatprep.subr.mxu0 0.0
  %280 = vmatpush2.xpose.msra.mxu0 0.0
  %281 = vmatprep.subr.mxu0 0.0
  %282 = vmatpush2.xpose.msra.mxu0 0.0
  %283 = vmatprep.subr.mxu0 0.0
  %284 = vmatpush2.xpose.msra.mxu0 0.0
  %285 = vmatprep.subr.mxu0 0.0
  %286 = vmatpush2.xpose.msra.mxu0 0.0
  %287 = vmatprep.subr.mxu0 0.0
  %288 = vmatpush2.xpose.msra.mxu0 0.0
  %289 = vmatprep.subr.mxu0 0.0
  %290 = vmatpush2.xpose.msra.mxu0 0.0
  %291 = vmatprep.subr.mxu0 0.0
  %292 = vmatpush2.xpose.msra.mxu0 0.0
  %293 = vmatprep.subr.mxu0 0.0
  %294 = vmatpush2.xpose.msra.mxu0 0.0
  %295 = vmatprep.subr.mxu0 0.0
  %296 = vmatpush2.xpose.msra.mxu0 0.0
  %297 = vmatprep.subr.mxu0 0.0
  %298 = vmatpush2.xpose.msra.mxu0 0.0
  %299 = vmatprep.subr.mxu0 0.0
  %300 = vmatpush2.xpose.msra.mxu0 0.0
  %301 = vmatprep.subr.mxu0 0.0
  %302 = vmatpush2.xpose.msra.mxu0 0.0
  %303 = vmatprep.mubr.f32.mxu0 0.0
  %304 = vmatmul.mubr.f32.gmra.mxu0 %v237
  %v305 = vpop.f32.mrf.mxu0
  %v306 = vadd.f32 0.0, %v305
  %v307 = vpop.f32.mrf.mxu0
  %308 = vdwg.mxu0
  %v310 = vrot.slane %v306, 7
  %v312 = vadd.f32 %v140, %v310
  %v313 = vtanh.pop %v312
  %vm314 = vcmask 254977
  %315 = vst.msk [vmem:[#allocation2] sm:$0x2] %vm314, %v313
  %v317 = vrot.slane %v313, 1
  %v318 = vsel %vm146, %v317, 0
  %320 = vmatprep.subr.mxu0 0.0
  %321 = vmatpush1.xpose.msra.mxu0 0.0
  %322 = vmatprep.subr.mxu0 0.0
  %323 = vmatpush1.xpose.msra.mxu0 0.0
  %324 = vmatprep.subr.mxu0 0.0
  %325 = vmatpush1.xpose.msra.mxu0 0.0
  %326 = vmatprep.subr.mxu0 0.0
  %327 = vmatpush1.xpose.msra.mxu0 0.0
  %328 = vmatprep.subr.mxu0 0.0
  %329 = vmatpush1.xpose.msra.mxu0 0.0
  %330 = vmatprep.subr.mxu0 0.0
  %331 = vmatpush1.xpose.msra.mxu0 0.0
  %332 = vmatprep.subr.mxu0 0.0
  %333 = vmatpush1.xpose.msra.mxu0 0.0
  %334 = vmatprep.subr.mxu0 0.0
  %335 = vmatpush1.xpose.msra.mxu0 0.0
  %336 = vmatprep.subr.mxu0 0.0
  %337 = vmatpush1.xpose.msra.mxu0 0.0
  %338 = vmatprep.subr.mxu0 0.0
  %339 = vmatpush1.xpose.msra.mxu0 0.0
  %340 = vmatprep.subr.mxu0 0.0
  %341 = vmatpush1.xpose.msra.mxu0 0.0
  %342 = vmatprep.subr.mxu0 0.0
  %343 = vmatpush1.xpose.msra.mxu0 0.0
  %344 = vmatprep.subr.mxu0 0.0
  %345 = vmatpush1.xpose.msra.mxu0 %v160
  %346 = vmatprep.subr.mxu0 0.0
  %347 = vmatpush1.xpose.msra.mxu0 %v157
  %348 = vmatprep.subr.mxu0 0.0
  %349 = vmatpush1.xpose.msra.mxu0 %v154
  %350 = vmatprep.subr.mxu0 0.0
  %351 = vmatpush1.xpose.msra.mxu0 %v151
  %352 = vmatprep.subr.mxu0 0.0
  %353 = vmatpush2.xpose.msra.mxu0 0.0
  %354 = vmatprep.subr.mxu0 0.0
  %355 = vmatpush2.xpose.msra.mxu0 0.0
  %356 = vmatprep.subr.mxu0 0.0
  %357 = vmatpush2.xpose.msra.mxu0 0.0
  %358 = vmatprep.subr.mxu0 0.0
  %359 = vmatpush2.xpose.msra.mxu0 0.0
  %360 = vmatprep.subr.mxu0 0.0
  %361 = vmatpush2.xpose.msra.mxu0 0.0
  %362 = vmatprep.subr.mxu0 0.0
  %363 = vmatpush2.xpose.msra.mxu0 0.0
  %364 = vmatprep.subr.mxu0 0.0
  %365 = vmatpush2.xpose.msra.mxu0 0.0
  %366 = vmatprep.subr.mxu0 0.0
  %367 = vmatpush2.xpose.msra.mxu0 0.0
  %368 = vmatprep.subr.mxu0 0.0
  %369 = vmatpush2.xpose.msra.mxu0 0.0
  %370 = vmatprep.subr.mxu0 0.0
  %371 = vmatpush2.xpose.msra.mxu0 0.0
  %372 = vmatprep.subr.mxu0 0.0
  %373 = vmatpush2.xpose.msra.mxu0 0.0
  %374 = vmatprep.subr.mxu0 0.0
  %375 = vmatpush2.xpose.msra.mxu0 0.0
  %376 = vmatprep.subr.mxu0 0.0
  %377 = vmatpush2.xpose.msra.mxu0 0.0
  %378 = vmatprep.subr.mxu0 0.0
  %379 = vmatpush2.xpose.msra.mxu0 0.0
  %380 = vmatprep.subr.mxu0 0.0
  %381 = vmatpush2.xpose.msra.mxu0 0.0
  %382 = vmatprep.subr.mxu0 0.0
  %383 = vmatpush2.xpose.msra.mxu0 0.0
  %384 = vmatprep.mubr.f32.mxu0 0.0
  %385 = vmatmul.mubr.f32.gmra.mxu0 %v318
  %v386 = vpop.f32.mrf.mxu0
  %v387 = vadd.f32 0.0, %v386
  %v388 = vpop.f32.mrf.mxu0
  %389 = vdwg.mxu0
  %v391 = vrot.slane %v387, 6
  %v393 = vadd.f32 %v140, %v391
  %v394 = vtanh.pop %v393
  %vm395 = vcmask 256002
  %396 = vst.msk [vmem:[#allocation2] sm:$0x4] %vm395, %v394
  %v398 = vrot.slane %v394, 2
  %v399 = vsel %vm146, %v398, 0
  %401 = vmatprep.subr.mxu0 0.0
  %402 = vmatpush1.xpose.msra.mxu0 0.0
  %403 = vmatprep.subr.mxu0 0.0
  %404 = vmatpush1.xpose.msra.mxu0 0.0
  %405 = vmatprep.subr.mxu0 0.0
  %406 = vmatpush1.xpose.msra.mxu0 0.0
  %407 = vmatprep.subr.mxu0 0.0
  %408 = vmatpush1.xpose.msra.mxu0 0.0
  %409 = vmatprep.subr.mxu0 0.0
  %410 = vmatpush1.xpose.msra.mxu0 0.0
  %411 = vmatprep.subr.mxu0 0.0
  %412 = vmatpush1.xpose.msra.mxu0 0.0
  %413 = vmatprep.subr.mxu0 0.0
  %414 = vmatpush1.xpose.msra.mxu0 0.0
  %415 = vmatprep.subr.mxu0 0.0
  %416 = vmatpush1.xpose.msra.mxu0 0.0
  %417 = vmatprep.subr.mxu0 0.0
  %418 = vmatpush1.xpose.msra.mxu0 0.0
  %419 = vmatprep.subr.mxu0 0.0
  %420 = vmatpush1.xpose.msra.mxu0 0.0
  %421 = vmatprep.subr.mxu0 0.0
  %422 = vmatpush1.xpose.msra.mxu0 0.0
  %423 = vmatprep.subr.mxu0 0.0
  %424 = vmatpush1.xpose.msra.mxu0 0.0
  %425 = vmatprep.subr.mxu0 0.0
  %426 = vmatpush1.xpose.msra.mxu0 %v160
  %427 = vmatprep.subr.mxu0 0.0
  %428 = vmatpush1.xpose.msra.mxu0 %v157
  %429 = vmatprep.subr.mxu0 0.0
  %430 = vmatpush1.xpose.msra.mxu0 %v154
  %431 = vmatprep.subr.mxu0 0.0
  %432 = vmatpush1.xpose.msra.mxu0 %v151
  %433 = vmatprep.subr.mxu0 0.0
  %434 = vmatpush2.xpose.msra.mxu0 0.0
  %435 = vmatprep.subr.mxu0 0.0
  %436 = vmatpush2.xpose.msra.mxu0 0.0
  %437 = vmatprep.subr.mxu0 0.0
  %438 = vmatpush2.xpose.msra.mxu0 0.0
  %439 = vmatprep.subr.mxu0 0.0
  %440 = vmatpush2.xpose.msra.mxu0 0.0
  %441 = vmatprep.subr.mxu0 0.0
  %442 = vmatpush2.xpose.msra.mxu0 0.0
  %443 = vmatprep.subr.mxu0 0.0
  %444 = vmatpush2.xpose.msra.mxu0 0.0
  %445 = vmatprep.subr.mxu0 0.0
  %446 = vmatpush2.xpose.msra.mxu0 0.0
  %447 = vmatprep.subr.mxu0 0.0
  %448 = vmatpush2.xpose.msra.mxu0 0.0
  %449 = vmatprep.subr.mxu0 0.0
  %450 = vmatpush2.xpose.msra.mxu0 0.0
  %451 = vmatprep.subr.mxu0 0.0
  %452 = vmatpush2.xpose.msra.mxu0 0.0
  %453 = vmatprep.subr.mxu0 0.0
  %454 = vmatpush2.xpose.msra.mxu0 0.0
  %455 = vmatprep.subr.mxu0 0.0
  %456 = vmatpush2.xpose.msra.mxu0 0.0
  %457 = vmatprep.subr.mxu0 0.0
  %458 = vmatpush2.xpose.msra.mxu0 0.0
  %459 = vmatprep.subr.mxu0 0.0
  %460 = vmatpush2.xpose.msra.mxu0 0.0
  %461 = vmatprep.subr.mxu0 0.0
  %462 = vmatpush2.xpose.msra.mxu0 0.0
  %463 = vmatprep.subr.mxu0 0.0
  %464 = vmatpush2.xpose.msra.mxu0 0.0
  %465 = vmatprep.mubr.f32.mxu0 0.0
  %466 = vmatmul.mubr.f32.gmra.mxu0 %v399
  %v467 = vpop.f32.mrf.mxu0
  %v468 = vadd.f32 0.0, %v467
  %v469 = vpop.f32.mrf.mxu0
  %470 = vdwg.mxu0
  %v472 = vrot.slane %v468, 5
  %v474 = vadd.f32 %v140, %v472
  %v475 = vtanh.pop %v474
  %vm476 = vcmask 257027
  %477 = vst.msk [vmem:[#allocation2] sm:$0x8] %vm476, %v475
  %v479 = vrot.slane %v475, 3
  %v480 = vsel %vm146, %v479, 0
  %482 = vmatprep.subr.mxu0 0.0
  %483 = vmatpush1.xpose.msra.mxu0 0.0
  %484 = vmatprep.subr.mxu0 0.0
  %485 = vmatpush1.xpose.msra.mxu0 0.0
  %486 = vmatprep.subr.mxu0 0.0
  %487 = vmatpush1.xpose.msra.mxu0 0.0
  %488 = vmatprep.subr.mxu0 0.0
  %489 = vmatpush1.xpose.msra.mxu0 0.0
  %490 = vmatprep.subr.mxu0 0.0
  %491 = vmatpush1.xpose.msra.mxu0 0.0
  %492 = vmatprep.subr.mxu0 0.0
  %493 = vmatpush1.xpose.msra.mxu0 0.0
  %494 = vmatprep.subr.mxu0 0.0
  %495 = vmatpush1.xpose.msra.mxu0 0.0
  %496 = vmatprep.subr.mxu0 0.0
  %497 = vmatpush1.xpose.msra.mxu0 0.0
  %498 = vmatprep.subr.mxu0 0.0
  %499 = vmatpush1.xpose.msra.mxu0 0.0
  %500 = vmatprep.subr.mxu0 0.0
  %501 = vmatpush1.xpose.msra.mxu0 0.0
  %502 = vmatprep.subr.mxu0 0.0
  %503 = vmatpush1.xpose.msra.mxu0 0.0
  %504 = vmatprep.subr.mxu0 0.0
  %505 = vmatpush1.xpose.msra.mxu0 0.0
  %506 = vmatprep.subr.mxu0 0.0
  %507 = vmatpush1.xpose.msra.mxu0 %v160
  %508 = vmatprep.subr.mxu0 0.0
  %509 = vmatpush1.xpose.msra.mxu0 %v157
  %510 = vmatprep.subr.mxu0 0.0
  %511 = vmatpush1.xpose.msra.mxu0 %v154
  %512 = vmatprep.subr.mxu0 0.0
  %513 = vmatpush1.xpose.msra.mxu0 %v151
  %514 = vmatprep.subr.mxu0 0.0
  %515 = vmatpush2.xpose.msra.mxu0 0.0
  %516 = vmatprep.subr.mxu0 0.0
  %517 = vmatpush2.xpose.msra.mxu0 0.0
  %518 = vmatprep.subr.mxu0 0.0
  %519 = vmatpush2.xpose.msra.mxu0 0.0
  %520 = vmatprep.subr.mxu0 0.0
  %521 = vmatpush2.xpose.msra.mxu0 0.0
  %522 = vmatprep.subr.mxu0 0.0
  %523 = vmatpush2.xpose.msra.mxu0 0.0
  %524 = vmatprep.subr.mxu0 0.0
  %525 = vmatpush2.xpose.msra.mxu0 0.0
  %526 = vmatprep.subr.mxu0 0.0
  %527 = vmatpush2.xpose.msra.mxu0 0.0
  %528 = vmatprep.subr.mxu0 0.0
  %529 = vmatpush2.xpose.msra.mxu0 0.0
  %530 = vmatprep.subr.mxu0 0.0
  %531 = vmatpush2.xpose.msra.mxu0 0.0
  %532 = vmatprep.subr.mxu0 0.0
  %533 = vmatpush2.xpose.msra.mxu0 0.0
  %534 = vmatprep.subr.mxu0 0.0
  %535 = vmatpush2.xpose.msra.mxu0 0.0
  %536 = vmatprep.subr.mxu0 0.0
  %537 = vmatpush2.xpose.msra.mxu0 0.0
  %538 = vmatprep.subr.mxu0 0.0
  %539 = vmatpush2.xpose.msra.mxu0 0.0
  %540 = vmatprep.subr.mxu0 0.0
  %541 = vmatpush2.xpose.msra.mxu0 0.0
  %542 = vmatprep.subr.mxu0 0.0
  %543 = vmatpush2.xpose.msra.mxu0 0.0
  %544 = vmatprep.subr.mxu0 0.0
  %545 = vmatpush2.xpose.msra.mxu0 0.0
  %546 = vmatprep.mubr.f32.mxu0 0.0
  %547 = vmatmul.mubr.f32.gmra.mxu0 %v480
  %v548 = vpop.f32.mrf.mxu0
  %v549 = vadd.f32 0.0, %v548
  %v550 = vpop.f32.mrf.mxu0
  %551 = vdwg.mxu0
  %v553 = vrot.slane %v549, 4
  %v555 = vadd.f32 %v140, %v553
  %v556 = vtanh.pop %v555
  %vm557 = vcmask 258052
  %558 = vst.msk [vmem:[#allocation2] sm:$0x10] %vm557, %v556
  %v560 = vrot.slane %v556, 4
  %v561 = vsel %vm146, %v560, 0
  %563 = vmatprep.subr.mxu0 0.0
  %564 = vmatpush1.xpose.msra.mxu0 0.0
  %565 = vmatprep.subr.mxu0 0.0
  %566 = vmatpush1.xpose.msra.mxu0 0.0
  %567 = vmatprep.subr.mxu0 0.0
  %568 = vmatpush1.xpose.msra.mxu0 0.0
  %569 = vmatprep.subr.mxu0 0.0
  %570 = vmatpush1.xpose.msra.mxu0 0.0
  %571 = vmatprep.subr.mxu0 0.0
  %572 = vmatpush1.xpose.msra.mxu0 0.0
  %573 = vmatprep.subr.mxu0 0.0
  %574 = vmatpush1.xpose.msra.mxu0 0.0
  %575 = vmatprep.subr.mxu0 0.0
  %576 = vmatpush1.xpose.msra.mxu0 0.0
  %577 = vmatprep.subr.mxu0 0.0
  %578 = vmatpush1.xpose.msra.mxu0 0.0
  %579 = vmatprep.subr.mxu0 0.0
  %580 = vmatpush1.xpose.msra.mxu0 0.0
  %581 = vmatprep.subr.mxu0 0.0
  %582 = vmatpush1.xpose.msra.mxu0 0.0
  %583 = vmatprep.subr.mxu0 0.0
  %584 = vmatpush1.xpose.msra.mxu0 0.0
  %585 = vmatprep.subr.mxu0 0.0
  %586 = vmatpush1.xpose.msra.mxu0 0.0
  %587 = vmatprep.subr.mxu0 0.0
  %588 = vmatpush1.xpose.msra.mxu0 %v160
  %589 = vmatprep.subr.mxu0 0.0
  %590 = vmatpush1.xpose.msra.mxu0 %v157
  %591 = vmatprep.subr.mxu0 0.0
  %592 = vmatpush1.xpose.msra.mxu0 %v154
  %593 = vmatprep.subr.mxu0 0.0
  %594 = vmatpush1.xpose.msra.mxu0 %v151
  %595 = vmatprep.subr.mxu0 0.0
  %596 = vmatpush2.xpose.msra.mxu0 0.0
  %597 = vmatprep.subr.mxu0 0.0
  %598 = vmatpush2.xpose.msra.mxu0 0.0
  %599 = vmatprep.subr.mxu0 0.0
  %600 = vmatpush2.xpose.msra.mxu0 0.0
  %601 = vmatprep.subr.mxu0 0.0
  %602 = vmatpush2.xpose.msra.mxu0 0.0
  %603 = vmatprep.subr.mxu0 0.0
  %604 = vmatpush2.xpose.msra.mxu0 0.0
  %605 = vmatprep.subr.mxu0 0.0
  %606 = vmatpush2.xpose.msra.mxu0 0.0
  %607 = vmatprep.subr.mxu0 0.0
  %608 = vmatpush2.xpose.msra.mxu0 0.0
  %609 = vmatprep.subr.mxu0 0.0
  %610 = vmatpush2.xpose.msra.mxu0 0.0
  %611 = vmatprep.subr.mxu0 0.0
  %612 = vmatpush2.xpose.msra.mxu0 0.0
  %613 = vmatprep.subr.mxu0 0.0
  %614 = vmatpush2.xpose.msra.mxu0 0.0
  %615 = vmatprep.subr.mxu0 0.0
  %616 = vmatpush2.xpose.msra.mxu0 0.0
  %617 = vmatprep.subr.mxu0 0.0
  %618 = vmatpush2.xpose.msra.mxu0 0.0
  %619 = vmatprep.subr.mxu0 0.0
  %620 = vmatpush2.xpose.msra.mxu0 0.0
  %621 = vmatprep.subr.mxu0 0.0
  %622 = vmatpush2.xpose.msra.mxu0 0.0
  %623 = vmatprep.subr.mxu0 0.0
  %624 = vmatpush2.xpose.msra.mxu0 0.0
  %625 = vmatprep.subr.mxu0 0.0
  %626 = vmatpush2.xpose.msra.mxu0 0.0
  %627 = vmatprep.mubr.f32.mxu0 0.0
  %628 = vmatmul.mubr.f32.gmra.mxu0 %v561
  %v629 = vpop.f32.mrf.mxu0
  %v630 = vadd.f32 0.0, %v629
  %v631 = vpop.f32.mrf.mxu0
  %632 = vdwg.mxu0
  %v634 = vrot.slane %v630, 3
  %v636 = vadd.f32 %v140, %v634
  %v637 = vtanh.pop %v636
  %vm638 = vcmask 259077
  %639 = vst.msk [vmem:[#allocation2] sm:$0x20] %vm638, %v637
  %v641 = vrot.slane %v637, 5
  %v642 = vsel %vm146, %v641, 0
  %644 = vmatprep.subr.mxu0 0.0
  %645 = vmatpush1.xpose.msra.mxu0 0.0
  %646 = vmatprep.subr.mxu0 0.0
  %647 = vmatpush1.xpose.msra.mxu0 0.0
  %648 = vmatprep.subr.mxu0 0.0
  %649 = vmatpush1.xpose.msra.mxu0 0.0
  %650 = vmatprep.subr.mxu0 0.0
  %651 = vmatpush1.xpose.msra.mxu0 0.0
  %652 = vmatprep.subr.mxu0 0.0
  %653 = vmatpush1.xpose.msra.mxu0 0.0
  %654 = vmatprep.subr.mxu0 0.0
  %655 = vmatpush1.xpose.msra.mxu0 0.0
  %656 = vmatprep.subr.mxu0 0.0
  %657 = vmatpush1.xpose.msra.mxu0 0.0
  %658 = vmatprep.subr.mxu0 0.0
  %659 = vmatpush1.xpose.msra.mxu0 0.0
  %660 = vmatprep.subr.mxu0 0.0
  %661 = vmatpush1.xpose.msra.mxu0 0.0
  %662 = vmatprep.subr.mxu0 0.0
  %663 = vmatpush1.xpose.msra.mxu0 0.0
  %664 = vmatprep.subr.mxu0 0.0
  %665 = vmatpush1.xpose.msra.mxu0 0.0
  %666 = vmatprep.subr.mxu0 0.0
  %667 = vmatpush1.xpose.msra.mxu0 0.0
  %668 = vmatprep.subr.mxu0 0.0
  %669 = vmatpush1.xpose.msra.mxu0 %v160
  %670 = vmatprep.subr.mxu0 0.0
  %671 = vmatpush1.xpose.msra.mxu0 %v157
  %672 = vmatprep.subr.mxu0 0.0
  %673 = vmatpush1.xpose.msra.mxu0 %v154
  %674 = vmatprep.subr.mxu0 0.0
  %675 = vmatpush1.xpose.msra.mxu0 %v151
  %676 = vmatprep.subr.mxu0 0.0
  %677 = vmatpush2.xpose.msra.mxu0 0.0
  %678 = vmatprep.subr.mxu0 0.0
  %679 = vmatpush2.xpose.msra.mxu0 0.0
  %680 = vmatprep.subr.mxu0 0.0
  %681 = vmatpush2.xpose.msra.mxu0 0.0
  %682 = vmatprep.subr.mxu0 0.0
  %683 = vmatpush2.xpose.msra.mxu0 0.0
  %684 = vmatprep.subr.mxu0 0.0
  %685 = vmatpush2.xpose.msra.mxu0 0.0
  %686 = vmatprep.subr.mxu0 0.0
  %687 = vmatpush2.xpose.msra.mxu0 0.0
  %688 = vmatprep.subr.mxu0 0.0
  %689 = vmatpush2.xpose.msra.mxu0 0.0
  %690 = vmatprep.subr.mxu0 0.0
  %691 = vmatpush2.xpose.msra.mxu0 0.0
  %692 = vmatprep.subr.mxu0 0.0
  %693 = vmatpush2.xpose.msra.mxu0 0.0
  %694 = vmatprep.subr.mxu0 0.0
  %695 = vmatpush2.xpose.msra.mxu0 0.0
  %696 = vmatprep.subr.mxu0 0.0
  %697 = vmatpush2.xpose.msra.mxu0 0.0
  %698 = vmatprep.subr.mxu0 0.0
  %699 = vmatpush2.xpose.msra.mxu0 0.0
  %700 = vmatprep.subr.mxu0 0.0
  %701 = vmatpush2.xpose.msra.mxu0 0.0
  %702 = vmatprep.subr.mxu0 0.0
  %703 = vmatpush2.xpose.msra.mxu0 0.0
  %704 = vmatprep.subr.mxu0 0.0
  %705 = vmatpush2.xpose.msra.mxu0 0.0
  %706 = vmatprep.subr.mxu0 0.0
  %707 = vmatpush2.xpose.msra.mxu0 0.0
  %708 = vmatprep.mubr.f32.mxu0 0.0
  %709 = vmatmul.mubr.f32.gmra.mxu0 %v642
  %v710 = vpop.f32.mrf.mxu0
  %v711 = vadd.f32 0.0, %v710
  %v712 = vpop.f32.mrf.mxu0
  %713 = vdwg.mxu0
  %v715 = vrot.slane %v711, 2
  %v717 = vadd.f32 %v140, %v715
  %v718 = vtanh.pop %v717
  %vm719 = vcmask 260102
  %720 = vst.msk [vmem:[#allocation2] sm:$0x40] %vm719, %v718
  %v722 = vrot.slane %v718, 6
  %v723 = vsel %vm146, %v722, 0
  %725 = vmatprep.subr.mxu0 0.0
  %726 = vmatpush1.xpose.msra.mxu0 0.0
  %727 = vmatprep.subr.mxu0 0.0
  %728 = vmatpush1.xpose.msra.mxu0 0.0
  %729 = vmatprep.subr.mxu0 0.0
  %730 = vmatpush1.xpose.msra.mxu0 0.0
  %731 = vmatprep.subr.mxu0 0.0
  %732 = vmatpush1.xpose.msra.mxu0 0.0
  %733 = vmatprep.subr.mxu0 0.0
  %734 = vmatpush1.xpose.msra.mxu0 0.0
  %735 = vmatprep.subr.mxu0 0.0
  %736 = vmatpush1.xpose.msra.mxu0 0.0
  %737 = vmatprep.subr.mxu0 0.0
  %738 = vmatpush1.xpose.msra.mxu0 0.0
  %739 = vmatprep.subr.mxu0 0.0
  %740 = vmatpush1.xpose.msra.mxu0 0.0
  %741 = vmatprep.subr.mxu0 0.0
  %742 = vmatpush1.xpose.msra.mxu0 0.0
  %743 = vmatprep.subr.mxu0 0.0
  %744 = vmatpush1.xpose.msra.mxu0 0.0
  %745 = vmatprep.subr.mxu0 0.0
  %746 = vmatpush1.xpose.msra.mxu0 0.0
  %747 = vmatprep.subr.mxu0 0.0
  %748 = vmatpush1.xpose.msra.mxu0 0.0
  %749 = vmatprep.subr.mxu0 0.0
  %750 = vmatpush1.xpose.msra.mxu0 %v160
  %751 = vmatprep.subr.mxu0 0.0
  %752 = vmatpush1.xpose.msra.mxu0 %v157
  %753 = vmatprep.subr.mxu0 0.0
  %754 = vmatpush1.xpose.msra.mxu0 %v154
  %755 = vmatprep.subr.mxu0 0.0
  %756 = vmatpush1.xpose.msra.mxu0 %v151
  %757 = vmatprep.subr.mxu0 0.0
  %758 = vmatpush2.xpose.msra.mxu0 0.0
  %759 = vmatprep.subr.mxu0 0.0
  %760 = vmatpush2.xpose.msra.mxu0 0.0
  %761 = vmatprep.subr.mxu0 0.0
  %762 = vmatpush2.xpose.msra.mxu0 0.0
  %763 = vmatprep.subr.mxu0 0.0
  %764 = vmatpush2.xpose.msra.mxu0 0.0
  %765 = vmatprep.subr.mxu0 0.0
  %766 = vmatpush2.xpose.msra.mxu0 0.0
  %767 = vmatprep.subr.mxu0 0.0
  %768 = vmatpush2.xpose.msra.mxu0 0.0
  %769 = vmatprep.subr.mxu0 0.0
  %770 = vmatpush2.xpose.msra.mxu0 0.0
  %771 = vmatprep.subr.mxu0 0.0
  %772 = vmatpush2.xpose.msra.mxu0 0.0
  %773 = vmatprep.subr.mxu0 0.0
  %774 = vmatpush2.xpose.msra.mxu0 0.0
  %775 = vmatprep.subr.mxu0 0.0
  %776 = vmatpush2.xpose.msra.mxu0 0.0
  %777 = vmatprep.subr.mxu0 0.0
  %778 = vmatpush2.xpose.msra.mxu0 0.0
  %779 = vmatprep.subr.mxu0 0.0
  %780 = vmatpush2.xpose.msra.mxu0 0.0
  %781 = vmatprep.subr.mxu0 0.0
  %782 = vmatpush2.xpose.msra.mxu0 0.0
  %783 = vmatprep.subr.mxu0 0.0
  %784 = vmatpush2.xpose.msra.mxu0 0.0
  %785 = vmatprep.subr.mxu0 0.0
  %786 = vmatpush2.xpose.msra.mxu0 0.0
  %787 = vmatprep.subr.mxu0 0.0
  %788 = vmatpush2.xpose.msra.mxu0 0.0
  %789 = vmatprep.mubr.f32.mxu0 0.0
  %790 = vmatmul.mubr.f32.gmra.mxu0 %v723
  %v791 = vpop.f32.mrf.mxu0
  %v792 = vadd.f32 0.0, %v791
  %v793 = vpop.f32.mrf.mxu0
  %794 = vdwg.mxu0
  %v796 = vrot.slane %v792, 1
  %v798 = vadd.f32 %v140, %v796
  %v799 = vtanh.pop %v798
  %vm800 = vcmask 261127
  %801 = vst.msk [vmem:[#allocation2] sm:$0x80] %vm800, %v799
  %v802 = vadd.f32 %v141, %v229
  %v803 = vtanh.pop %v802
  %804 = vst.msk [vmem:[#allocation2 + $0x8] sm:$0x1] %vm234, %v803
  %v806 = vsel %vm146, %v803, 0
  %808 = vmatprep.subr.mxu0 0.0
  %809 = vmatpush1.xpose.msra.mxu0 0.0
  %810 = vmatprep.subr.mxu0 0.0
  %811 = vmatpush1.xpose.msra.mxu0 0.0
  %812 = vmatprep.subr.mxu0 0.0
  %813 = vmatpush1.xpose.msra.mxu0 0.0
  %814 = vmatprep.subr.mxu0 0.0
  %815 = vmatpush1.xpose.msra.mxu0 0.0
  %816 = vmatprep.subr.mxu0 0.0
  %817 = vmatpush1.xpose.msra.mxu0 0.0
  %818 = vmatprep.subr.mxu0 0.0
  %819 = vmatpush1.xpose.msra.mxu0 0.0
  %820 = vmatprep.subr.mxu0 0.0
  %821 = vmatpush1.xpose.msra.mxu0 0.0
  %822 = vmatprep.subr.mxu0 0.0
  %823 = vmatpush1.xpose.msra.mxu0 0.0
  %824 = vmatprep.subr.mxu0 0.0
  %825 = vmatpush1.xpose.msra.mxu0 0.0
  %826 = vmatprep.subr.mxu0 0.0
  %827 = vmatpush1.xpose.msra.mxu0 0.0
  %828 = vmatprep.subr.mxu0 0.0
  %829 = vmatpush1.xpose.msra.mxu0 0.0
  %830 = vmatprep.subr.mxu0 0.0
  %831 = vmatpush1.xpose.msra.mxu0 0.0
  %832 = vmatprep.subr.mxu0 0.0
  %833 = vmatpush1.xpose.msra.mxu0 %v160
  %834 = vmatprep.subr.mxu0 0.0
  %835 = vmatpush1.xpose.msra.mxu0 %v157
  %836 = vmatprep.subr.mxu0 0.0
  %837 = vmatpush1.xpose.msra.mxu0 %v154
  %838 = vmatprep.subr.mxu0 0.0
  %839 = vmatpush1.xpose.msra.mxu0 %v151
  %840 = vmatprep.subr.mxu0 0.0
  %841 = vmatpush2.xpose.msra.mxu0 0.0
  %842 = vmatprep.subr.mxu0 0.0
  %843 = vmatpush2.xpose.msra.mxu0 0.0
  %844 = vmatprep.subr.mxu0 0.0
  %845 = vmatpush2.xpose.msra.mxu0 0.0
  %846 = vmatprep.subr.mxu0 0.0
  %847 = vmatpush2.xpose.msra.mxu0 0.0
  %848 = vmatprep.subr.mxu0 0.0
  %849 = vmatpush2.xpose.msra.mxu0 0.0
  %850 = vmatprep.subr.mxu0 0.0
  %851 = vmatpush2.xpose.msra.mxu0 0.0
  %852 = vmatprep.subr.mxu0 0.0
  %853 = vmatpush2.xpose.msra.mxu0 0.0
  %854 = vmatprep.subr.mxu0 0.0
  %855 = vmatpush2.xpose.msra.mxu0 0.0
  %856 = vmatprep.subr.mxu0 0.0
  %857 = vmatpush2.xpose.msra.mxu0 0.0
  %858 = vmatprep.subr.mxu0 0.0
  %859 = vmatpush2.xpose.msra.mxu0 0.0
  %860 = vmatprep.subr.mxu0 0.0
  %861 = vmatpush2.xpose.msra.mxu0 0.0
  %862 = vmatprep.subr.mxu0 0.0
  %863 = vmatpush2.xpose.msra.mxu0 0.0
  %864 = vmatprep.subr.mxu0 0.0
  %865 = vmatpush2.xpose.msra.mxu0 0.0
  %866 = vmatprep.subr.mxu0 0.0
  %867 = vmatpush2.xpose.msra.mxu0 0.0
  %868 = vmatprep.subr.mxu0 0.0
  %869 = vmatpush2.xpose.msra.mxu0 0.0
  %870 = vmatprep.subr.mxu0 0.0
  %871 = vmatpush2.xpose.msra.mxu0 0.0
  %872 = vmatprep.mubr.f32.mxu0 0.0
  %873 = vmatmul.mubr.f32.gmra.mxu0 %v806
  %v874 = vpop.f32.mrf.mxu0
  %v875 = vadd.f32 0.0, %v874
  %v876 = vpop.f32.mrf.mxu0
  %877 = vdwg.mxu0
  %v879 = vrot.slane %v875, 7
  %v881 = vadd.f32 %v141, %v879
  %v882 = vtanh.pop %v881
  %883 = vst.msk [vmem:[#allocation2 + $0x8] sm:$0x2] %vm314, %v882
  %v885 = vrot.slane %v882, 1
  %v886 = vsel %vm146, %v885, 0
  %888 = vmatprep.subr.mxu0 0.0
  %889 = vmatpush1.xpose.msra.mxu0 0.0
  %890 = vmatprep.subr.mxu0 0.0
  %891 = vmatpush1.xpose.msra.mxu0 0.0
  %892 = vmatprep.subr.mxu0 0.0
  %893 = vmatpush1.xpose.msra.mxu0 0.0
  %894 = vmatprep.subr.mxu0 0.0
  %895 = vmatpush1.xpose.msra.mxu0 0.0
  %896 = vmatprep.subr.mxu0 0.0
  %897 = vmatpush1.xpose.msra.mxu0 0.0
  %898 = vmatprep.subr.mxu0 0.0
  %899 = vmatpush1.xpose.msra.mxu0 0.0
  %900 = vmatprep.subr.mxu0 0.0
  %901 = vmatpush1.xpose.msra.mxu0 0.0
  %902 = vmatprep.subr.mxu0 0.0
  %903 = vmatpush1.xpose.msra.mxu0 0.0
  %904 = vmatprep.subr.mxu0 0.0
  %905 = vmatpush1.xpose.msra.mxu0 0.0
  %906 = vmatprep.subr.mxu0 0.0
  %907 = vmatpush1.xpose.msra.mxu0 0.0
  %908 = vmatprep.subr.mxu0 0.0
  %909 = vmatpush1.xpose.msra.mxu0 0.0
  %910 = vmatprep.subr.mxu0 0.0
  %911 = vmatpush1.xpose.msra.mxu0 0.0
  %912 = vmatprep.subr.mxu0 0.0
  %913 = vmatpush1.xpose.msra.mxu0 %v160
  %914 = vmatprep.subr.mxu0 0.0
  %915 = vmatpush1.xpose.msra.mxu0 %v157
  %916 = vmatprep.subr.mxu0 0.0
  %917 = vmatpush1.xpose.msra.mxu0 %v154
  %918 = vmatprep.subr.mxu0 0.0
  %919 = vmatpush1.xpose.msra.mxu0 %v151
  %920 = vmatprep.subr.mxu0 0.0
  %921 = vmatpush2.xpose.msra.mxu0 0.0
  %922 = vmatprep.subr.mxu0 0.0
  %923 = vmatpush2.xpose.msra.mxu0 0.0
  %924 = vmatprep.subr.mxu0 0.0
  %925 = vmatpush2.xpose.msra.mxu0 0.0
  %926 = vmatprep.subr.mxu0 0.0
  %927 = vmatpush2.xpose.msra.mxu0 0.0
  %928 = vmatprep.subr.mxu0 0.0
  %929 = vmatpush2.xpose.msra.mxu0 0.0
  %930 = vmatprep.subr.mxu0 0.0
  %931 = vmatpush2.xpose.msra.mxu0 0.0
  %932 = vmatprep.subr.mxu0 0.0
  %933 = vmatpush2.xpose.msra.mxu0 0.0
  %934 = vmatprep.subr.mxu0 0.0
  %935 = vmatpush2.xpose.msra.mxu0 0.0
  %936 = vmatprep.subr.mxu0 0.0
  %937 = vmatpush2.xpose.msra.mxu0 0.0
  %938 = vmatprep.subr.mxu0 0.0
  %939 = vmatpush2.xpose.msra.mxu0 0.0
  %940 = vmatprep.subr.mxu0 0.0
  %941 = vmatpush2.xpose.msra.mxu0 0.0
  %942 = vmatprep.subr.mxu0 0.0
  %943 = vmatpush2.xpose.msra.mxu0 0.0
  %944 = vmatprep.subr.mxu0 0.0
  %945 = vmatpush2.xpose.msra.mxu0 0.0
  %946 = vmatprep.subr.mxu0 0.0
  %947 = vmatpush2.xpose.msra.mxu0 0.0
  %948 = vmatprep.subr.mxu0 0.0
  %949 = vmatpush2.xpose.msra.mxu0 0.0
  %950 = vmatprep.subr.mxu0 0.0
  %951 = vmatpush2.xpose.msra.mxu0 0.0
  %952 = vmatprep.mubr.f32.mxu0 0.0
  %953 = vmatmul.mubr.f32.gmra.mxu0 %v886
  %v954 = vpop.f32.mrf.mxu0
  %v955 = vadd.f32 0.0, %v954
  %v956 = vpop.f32.mrf.mxu0
  %957 = vdwg.mxu0
  %v959 = vrot.slane %v955, 6
  %v961 = vadd.f32 %v141, %v959
  %v962 = vtanh.pop %v961
  %963 = vst.msk [vmem:[#allocation2 + $0x8] sm:$0x4] %vm395, %v962
  %v965 = vrot.slane %v962, 2
  %v966 = vsel %vm146, %v965, 0
  %968 = vmatprep.subr.mxu0 0.0
  %969 = vmatpush1.xpose.msra.mxu0 0.0
  %970 = vmatprep.subr.mxu0 0.0
  %971 = vmatpush1.xpose.msra.mxu0 0.0
  %972 = vmatprep.subr.mxu0 0.0
  %973 = vmatpush1.xpose.msra.mxu0 0.0
  %974 = vmatprep.subr.mxu0 0.0
  %975 = vmatpush1.xpose.msra.mxu0 0.0
  %976 = vmatprep.subr.mxu0 0.0
  %977 = vmatpush1.xpose.msra.mxu0 0.0
  %978 = vmatprep.subr.mxu0 0.0
  %979 = vmatpush1.xpose.msra.mxu0 0.0
  %980 = vmatprep.subr.mxu0 0.0
  %981 = vmatpush1.xpose.msra.mxu0 0.0
  %982 = vmatprep.subr.mxu0 0.0
  %983 = vmatpush1.xpose.msra.mxu0 0.0
  %984 = vmatprep.subr.mxu0 0.0
  %985 = vmatpush1.xpose.msra.mxu0 0.0
  %986 = vmatprep.subr.mxu0 0.0
  %987 = vmatpush1.xpose.msra.mxu0 0.0
  %988 = vmatprep.subr.mxu0 0.0
  %989 = vmatpush1.xpose.msra.mxu0 0.0
  %990 = vmatprep.subr.mxu0 0.0
  %991 = vmatpush1.xpose.msra.mxu0 0.0
  %992 = vmatprep.subr.mxu0 0.0
  %993 = vmatpush1.xpose.msra.mxu0 %v160
  %994 = vmatprep.subr.mxu0 0.0
  %995 = vmatpush1.xpose.msra.mxu0 %v157
  %996 = vmatprep.subr.mxu0 0.0
  %997 = vmatpush1.xpose.msra.mxu0 %v154
  %998 = vmatprep.subr.mxu0 0.0
  %999 = vmatpush1.xpose.msra.mxu0 %v151
  %1000 = vmatprep.subr.mxu0 0.0
  %1001 = vmatpush2.xpose.msra.mxu0 0.0
  %1002 = vmatprep.subr.mxu0 0.0
  %1003 = vmatpush2.xpose.msra.mxu0 0.0
  %1004 = vmatprep.subr.mxu0 0.0
  %1005 = vmatpush2.xpose.msra.mxu0 0.0
  %1006 = vmatprep.subr.mxu0 0.0
  %1007 = vmatpush2.xpose.msra.mxu0 0.0
  %1008 = vmatprep.subr.mxu0 0.0
  %1009 = vmatpush2.xpose.msra.mxu0 0.0
  %1010 = vmatprep.subr.mxu0 0.0
  %1011 = vmatpush2.xpose.msra.mxu0 0.0
  %1012 = vmatprep.subr.mxu0 0.0
  %1013 = vmatpush2.xpose.msra.mxu0 0.0
  %1014 = vmatprep.subr.mxu0 0.0
  %1015 = vmatpush2.xpose.msra.mxu0 0.0
  %1016 = vmatprep.subr.mxu0 0.0
  %1017 = vmatpush2.xpose.msra.mxu0 0.0
  %1018 = vmatprep.subr.mxu0 0.0
  %1019 = vmatpush2.xpose.msra.mxu0 0.0
  %1020 = vmatprep.subr.mxu0 0.0
  %1021 = vmatpush2.xpose.msra.mxu0 0.0
  %1022 = vmatprep.subr.mxu0 0.0
  %1023 = vmatpush2.xpose.msra.mxu0 0.0
  %1024 = vmatprep.subr.mxu0 0.0
  %1025 = vmatpush2.xpose.msra.mxu0 0.0
  %1026 = vmatprep.subr.mxu0 0.0
  %1027 = vmatpush2.xpose.msra.mxu0 0.0
  %1028 = vmatprep.subr.mxu0 0.0
  %1029 = vmatpush2.xpose.msra.mxu0 0.0
  %1030 = vmatprep.subr.mxu0 0.0
  %1031 = vmatpush2.xpose.msra.mxu0 0.0
  %1032 = vmatprep.mubr.f32.mxu0 0.0
  %1033 = vmatmul.mubr.f32.gmra.mxu0 %v966
  %v1034 = vpop.f32.mrf.mxu0
  %v1035 = vadd.f32 0.0, %v1034
  %v1036 = vpop.f32.mrf.mxu0
  %1037 = vdwg.mxu0
  %v1039 = vrot.slane %v1035, 5
  %v1041 = vadd.f32 %v141, %v1039
  %v1042 = vtanh.pop %v1041
  %1043 = vst.msk [vmem:[#allocation2 + $0x8] sm:$0x8] %vm476, %v1042
  %v1045 = vrot.slane %v1042, 3
  %v1046 = vsel %vm146, %v1045, 0
  %1048 = vmatprep.subr.mxu0 0.0
  %1049 = vmatpush1.xpose.msra.mxu0 0.0
  %1050 = vmatprep.subr.mxu0 0.0
  %1051 = vmatpush1.xpose.msra.mxu0 0.0
  %1052 = vmatprep.subr.mxu0 0.0
  %1053 = vmatpush1.xpose.msra.mxu0 0.0
  %1054 = vmatprep.subr.mxu0 0.0
  %1055 = vmatpush1.xpose.msra.mxu0 0.0
  %1056 = vmatprep.subr.mxu0 0.0
  %1057 = vmatpush1.xpose.msra.mxu0 0.0
  %1058 = vmatprep.subr.mxu0 0.0
  %1059 = vmatpush1.xpose.msra.mxu0 0.0
  %1060 = vmatprep.subr.mxu0 0.0
  %1061 = vmatpush1.xpose.msra.mxu0 0.0
  %1062 = vmatprep.subr.mxu0 0.0
  %1063 = vmatpush1.xpose.msra.mxu0 0.0
  %1064 = vmatprep.subr.mxu0 0.0
  %1065 = vmatpush1.xpose.msra.mxu0 0.0
  %1066 = vmatprep.subr.mxu0 0.0
  %1067 = vmatpush1.xpose.msra.mxu0 0.0
  %1068 = vmatprep.subr.mxu0 0.0
  %1069 = vmatpush1.xpose.msra.mxu0 0.0
  %1070 = vmatprep.subr.mxu0 0.0
  %1071 = vmatpush1.xpose.msra.mxu0 0.0
  %1072 = vmatprep.subr.mxu0 0.0
  %1073 = vmatpush1.xpose.msra.mxu0 %v160
  %1074 = vmatprep.subr.mxu0 0.0
  %1075 = vmatpush1.xpose.msra.mxu0 %v157
  %1076 = vmatprep.subr.mxu0 0.0
  %1077 = vmatpush1.xpose.msra.mxu0 %v154
  %1078 = vmatprep.subr.mxu0 0.0
  %1079 = vmatpush1.xpose.msra.mxu0 %v151
  %1080 = vmatprep.subr.mxu0 0.0
  %1081 = vmatpush2.xpose.msra.mxu0 0.0
  %1082 = vmatprep.subr.mxu0 0.0
  %1083 = vmatpush2.xpose.msra.mxu0 0.0
  %1084 = vmatprep.subr.mxu0 0.0
  %1085 = vmatpush2.xpose.msra.mxu0 0.0
  %1086 = vmatprep.subr.mxu0 0.0
  %1087 = vmatpush2.xpose.msra.mxu0 0.0
  %1088 = vmatprep.subr.mxu0 0.0
  %1089 = vmatpush2.xpose.msra.mxu0 0.0
  %1090 = vmatprep.subr.mxu0 0.0
  %1091 = vmatpush2.xpose.msra.mxu0 0.0
  %1092 = vmatprep.subr.mxu0 0.0
  %1093 = vmatpush2.xpose.msra.mxu0 0.0
  %1094 = vmatprep.subr.mxu0 0.0
  %1095 = vmatpush2.xpose.msra.mxu0 0.0
  %1096 = vmatprep.subr.mxu0 0.0
  %1097 = vmatpush2.xpose.msra.mxu0 0.0
  %1098 = vmatprep.subr.mxu0 0.0
  %1099 = vmatpush2.xpose.msra.mxu0 0.0
  %1100 = vmatprep.subr.mxu0 0.0
  %1101 = vmatpush2.xpose.msra.mxu0 0.0
  %1102 = vmatprep.subr.mxu0 0.0
  %1103 = vmatpush2.xpose.msra.mxu0 0.0
  %1104 = vmatprep.subr.mxu0 0.0
  %1105 = vmatpush2.xpose.msra.mxu0 0.0
  %1106 = vmatprep.subr.mxu0 0.0
  %1107 = vmatpush2.xpose.msra.mxu0 0.0
  %1108 = vmatprep.subr.mxu0 0.0
  %1109 = vmatpush2.xpose.msra.mxu0 0.0
  %1110 = vmatprep.subr.mxu0 0.0
  %1111 = vmatpush2.xpose.msra.mxu0 0.0
  %1112 = vmatprep.mubr.f32.mxu0 0.0
  %1113 = vmatmul.mubr.f32.gmra.mxu0 %v1046
  %v1114 = vpop.f32.mrf.mxu0
  %v1115 = vadd.f32 0.0, %v1114
  %v1116 = vpop.f32.mrf.mxu0
  %1117 = vdwg.mxu0
  %v1119 = vrot.slane %v1115, 4
  %v1121 = vadd.f32 %v141, %v1119
  %v1122 = vtanh.pop %v1121
  %1123 = vst.msk [vmem:[#allocation2 + $0x8] sm:$0x10] %vm557, %v1122
  %v1125 = vrot.slane %v1122, 4
  %v1126 = vsel %vm146, %v1125, 0
  %1128 = vmatprep.subr.mxu0 0.0
  %1129 = vmatpush1.xpose.msra.mxu0 0.0
  %1130 = vmatprep.subr.mxu0 0.0
  %1131 = vmatpush1.xpose.msra.mxu0 0.0
  %1132 = vmatprep.subr.mxu0 0.0
  %1133 = vmatpush1.xpose.msra.mxu0 0.0
  %1134 = vmatprep.subr.mxu0 0.0
  %1135 = vmatpush1.xpose.msra.mxu0 0.0
  %1136 = vmatprep.subr.mxu0 0.0
  %1137 = vmatpush1.xpose.msra.mxu0 0.0
  %1138 = vmatprep.subr.mxu0 0.0
  %1139 = vmatpush1.xpose.msra.mxu0 0.0
  %1140 = vmatprep.subr.mxu0 0.0
  %1141 = vmatpush1.xpose.msra.mxu0 0.0
  %1142 = vmatprep.subr.mxu0 0.0
  %1143 = vmatpush1.xpose.msra.mxu0 0.0
  %1144 = vmatprep.subr.mxu0 0.0
  %1145 = vmatpush1.xpose.msra.mxu0 0.0
  %1146 = vmatprep.subr.mxu0 0.0
  %1147 = vmatpush1.xpose.msra.mxu0 0.0
  %1148 = vmatprep.subr.mxu0 0.0
  %1149 = vmatpush1.xpose.msra.mxu0 0.0
  %1150 = vmatprep.subr.mxu0 0.0
  %1151 = vmatpush1.xpose.msra.mxu0 0.0
  %1152 = vmatprep.subr.mxu0 0.0
  %1153 = vmatpush1.xpose.msra.mxu0 %v160
  %1154 = vmatprep.subr.mxu0 0.0
  %1155 = vmatpush1.xpose.msra.mxu0 %v157
  %1156 = vmatprep.subr.mxu0 0.0
  %1157 = vmatpush1.xpose.msra.mxu0 %v154
  %1158 = vmatprep.subr.mxu0 0.0
  %1159 = vmatpush1.xpose.msra.mxu0 %v151
  %1160 = vmatprep.subr.mxu0 0.0
  %1161 = vmatpush2.xpose.msra.mxu0 0.0
  %1162 = vmatprep.subr.mxu0 0.0
  %1163 = vmatpush2.xpose.msra.mxu0 0.0
  %1164 = vmatprep.subr.mxu0 0.0
  %1165 = vmatpush2.xpose.msra.mxu0 0.0
  %1166 = vmatprep.subr.mxu0 0.0
  %1167 = vmatpush2.xpose.msra.mxu0 0.0
  %1168 = vmatprep.subr.mxu0 0.0
  %1169 = vmatpush2.xpose.msra.mxu0 0.0
  %1170 = vmatprep.subr.mxu0 0.0
  %1171 = vmatpush2.xpose.msra.mxu0 0.0
  %1172 = vmatprep.subr.mxu0 0.0
  %1173 = vmatpush2.xpose.msra.mxu0 0.0
  %1174 = vmatprep.subr.mxu0 0.0
  %1175 = vmatpush2.xpose.msra.mxu0 0.0
  %1176 = vmatprep.subr.mxu0 0.0
  %1177 = vmatpush2.xpose.msra.mxu0 0.0
  %1178 = vmatprep.subr.mxu0 0.0
  %1179 = vmatpush2.xpose.msra.mxu0 0.0
  %1180 = vmatprep.subr.mxu0 0.0
  %1181 = vmatpush2.xpose.msra.mxu0 0.0
  %1182 = vmatprep.subr.mxu0 0.0
  %1183 = vmatpush2.xpose.msra.mxu0 0.0
  %1184 = vmatprep.subr.mxu0 0.0
  %1185 = vmatpush2.xpose.msra.mxu0 0.0
  %1186 = vmatprep.subr.mxu0 0.0
  %1187 = vmatpush2.xpose.msra.mxu0 0.0
  %1188 = vmatprep.subr.mxu0 0.0
  %1189 = vmatpush2.xpose.msra.mxu0 0.0
  %1190 = vmatprep.subr.mxu0 0.0
  %1191 = vmatpush2.xpose.msra.mxu0 0.0
  %1192 = vmatprep.mubr.f32.mxu0 0.0
  %1193 = vmatmul.mubr.f32.gmra.mxu0 %v1126
  %v1194 = vpop.f32.mrf.mxu0
  %v1195 = vadd.f32 0.0, %v1194
  %v1196 = vpop.f32.mrf.mxu0
  %1197 = vdwg.mxu0
  %v1199 = vrot.slane %v1195, 3
  %v1201 = vadd.f32 %v141, %v1199
  %v1202 = vtanh.pop %v1201
  %1203 = vst.msk [vmem:[#allocation2 + $0x8] sm:$0x20] %vm638, %v1202
  %v1205 = vrot.slane %v1202, 5
  %v1206 = vsel %vm146, %v1205, 0
  %1208 = vmatprep.subr.mxu0 0.0
  %1209 = vmatpush1.xpose.msra.mxu0 0.0
  %1210 = vmatprep.subr.mxu0 0.0
  %1211 = vmatpush1.xpose.msra.mxu0 0.0
  %1212 = vmatprep.subr.mxu0 0.0
  %1213 = vmatpush1.xpose.msra.mxu0 0.0
  %1214 = vmatprep.subr.mxu0 0.0
  %1215 = vmatpush1.xpose.msra.mxu0 0.0
  %1216 = vmatprep.subr.mxu0 0.0
  %1217 = vmatpush1.xpose.msra.mxu0 0.0
  %1218 = vmatprep.subr.mxu0 0.0
  %1219 = vmatpush1.xpose.msra.mxu0 0.0
  %1220 = vmatprep.subr.mxu0 0.0
  %1221 = vmatpush1.xpose.msra.mxu0 0.0
  %1222 = vmatprep.subr.mxu0 0.0
  %1223 = vmatpush1.xpose.msra.mxu0 0.0
  %1224 = vmatprep.subr.mxu0 0.0
  %1225 = vmatpush1.xpose.msra.mxu0 0.0
  %1226 = vmatprep.subr.mxu0 0.0
  %1227 = vmatpush1.xpose.msra.mxu0 0.0
  %1228 = vmatprep.subr.mxu0 0.0
  %1229 = vmatpush1.xpose.msra.mxu0 0.0
  %1230 = vmatprep.subr.mxu0 0.0
  %1231 = vmatpush1.xpose.msra.mxu0 0.0
  %1232 = vmatprep.subr.mxu0 0.0
  %1233 = vmatpush1.xpose.msra.mxu0 %v160
  %1234 = vmatprep.subr.mxu0 0.0
  %1235 = vmatpush1.xpose.msra.mxu0 %v157
  %1236 = vmatprep.subr.mxu0 0.0
  %1237 = vmatpush1.xpose.msra.mxu0 %v154
  %1238 = vmatprep.subr.mxu0 0.0
  %1239 = vmatpush1.xpose.msra.mxu0 %v151
  %1240 = vmatprep.subr.mxu0 0.0
  %1241 = vmatpush2.xpose.msra.mxu0 0.0
  %1242 = vmatprep.subr.mxu0 0.0
  %1243 = vmatpush2.xpose.msra.mxu0 0.0
  %1244 = vmatprep.subr.mxu0 0.0
  %1245 = vmatpush2.xpose.msra.mxu0 0.0
  %1246 = vmatprep.subr.mxu0 0.0
  %1247 = vmatpush2.xpose.msra.mxu0 0.0
  %1248 = vmatprep.subr.mxu0 0.0
  %1249 = vmatpush2.xpose.msra.mxu0 0.0
  %1250 = vmatprep.subr.mxu0 0.0
  %1251 = vmatpush2.xpose.msra.mxu0 0.0
  %1252 = vmatprep.subr.mxu0 0.0
  %1253 = vmatpush2.xpose.msra.mxu0 0.0
  %1254 = vmatprep.subr.mxu0 0.0
  %1255 = vmatpush2.xpose.msra.mxu0 0.0
  %1256 = vmatprep.subr.mxu0 0.0
  %1257 = vmatpush2.xpose.msra.mxu0 0.0
  %1258 = vmatprep.subr.mxu0 0.0
  %1259 = vmatpush2.xpose.msra.mxu0 0.0
  %1260 = vmatprep.subr.mxu0 0.0
  %1261 = vmatpush2.xpose.msra.mxu0 0.0
  %1262 = vmatprep.subr.mxu0 0.0
  %1263 = vmatpush2.xpose.msra.mxu0 0.0
  %1264 = vmatprep.subr.mxu0 0.0
  %1265 = vmatpush2.xpose.msra.mxu0 0.0
  %1266 = vmatprep.subr.mxu0 0.0
  %1267 = vmatpush2.xpose.msra.mxu0 0.0
  %1268 = vmatprep.subr.mxu0 0.0
  %1269 = vmatpush2.xpose.msra.mxu0 0.0
  %1270 = vmatprep.subr.mxu0 0.0
  %1271 = vmatpush2.xpose.msra.mxu0 0.0
  %1272 = vmatprep.mubr.f32.mxu0 0.0
  %1273 = vmatmul.mubr.f32.gmra.mxu0 %v1206
  %v1274 = vpop.f32.mrf.mxu0
  %v1275 = vadd.f32 0.0, %v1274
  %v1276 = vpop.f32.mrf.mxu0
  %1277 = vdwg.mxu0
  %v1279 = vrot.slane %v1275, 2
  %v1281 = vadd.f32 %v141, %v1279
  %v1282 = vtanh.pop %v1281
  %1283 = vst.msk [vmem:[#allocation2 + $0x8] sm:$0x40] %vm719, %v1282
  %v1285 = vrot.slane %v1282, 6
  %v1286 = vsel %vm146, %v1285, 0
  %1288 = vmatprep.subr.mxu0 0.0
  %1289 = vmatpush1.xpose.msra.mxu0 0.0
  %1290 = vmatprep.subr.mxu0 0.0
  %1291 = vmatpush1.xpose.msra.mxu0 0.0
  %1292 = vmatprep.subr.mxu0 0.0
  %1293 = vmatpush1.xpose.msra.mxu0 0.0
  %1294 = vmatprep.subr.mxu0 0.0
  %1295 = vmatpush1.xpose.msra.mxu0 0.0
  %1296 = vmatprep.subr.mxu0 0.0
  %1297 = vmatpush1.xpose.msra.mxu0 0.0
  %1298 = vmatprep.subr.mxu0 0.0
  %1299 = vmatpush1.xpose.msra.mxu0 0.0
  %1300 = vmatprep.subr.mxu0 0.0
  %1301 = vmatpush1.xpose.msra.mxu0 0.0
  %1302 = vmatprep.subr.mxu0 0.0
  %1303 = vmatpush1.xpose.msra.mxu0 0.0
  %1304 = vmatprep.subr.mxu0 0.0
  %1305 = vmatpush1.xpose.msra.mxu0 0.0
  %1306 = vmatprep.subr.mxu0 0.0
  %1307 = vmatpush1.xpose.msra.mxu0 0.0
  %1308 = vmatprep.subr.mxu0 0.0
  %1309 = vmatpush1.xpose.msra.mxu0 0.0
  %1310 = vmatprep.subr.mxu0 0.0
  %1311 = vmatpush1.xpose.msra.mxu0 0.0
  %1312 = vmatprep.subr.mxu0 0.0
  %1313 = vmatpush1.xpose.msra.mxu0 %v160
  %1314 = vmatprep.subr.mxu0 0.0
  %1315 = vmatpush1.xpose.msra.mxu0 %v157
  %1316 = vmatprep.subr.mxu0 0.0
  %1317 = vmatpush1.xpose.msra.mxu0 %v154
  %1318 = vmatprep.subr.mxu0 0.0
  %1319 = vmatpush1.xpose.msra.mxu0 %v151
  %1320 = vmatprep.subr.mxu0 0.0
  %1321 = vmatpush2.xpose.msra.mxu0 0.0
  %1322 = vmatprep.subr.mxu0 0.0
  %1323 = vmatpush2.xpose.msra.mxu0 0.0
  %1324 = vmatprep.subr.mxu0 0.0
  %1325 = vmatpush2.xpose.msra.mxu0 0.0
  %1326 = vmatprep.subr.mxu0 0.0
  %1327 = vmatpush2.xpose.msra.mxu0 0.0
  %1328 = vmatprep.subr.mxu0 0.0
  %1329 = vmatpush2.xpose.msra.mxu0 0.0
  %1330 = vmatprep.subr.mxu0 0.0
  %1331 = vmatpush2.xpose.msra.mxu0 0.0
  %1332 = vmatprep.subr.mxu0 0.0
  %1333 = vmatpush2.xpose.msra.mxu0 0.0
  %1334 = vmatprep.subr.mxu0 0.0
  %1335 = vmatpush2.xpose.msra.mxu0 0.0
  %1336 = vmatprep.subr.mxu0 0.0
  %1337 = vmatpush2.xpose.msra.mxu0 0.0
  %1338 = vmatprep.subr.mxu0 0.0
  %1339 = vmatpush2.xpose.msra.mxu0 0.0
  %1340 = vmatprep.subr.mxu0 0.0
  %1341 = vmatpush2.xpose.msra.mxu0 0.0
  %1342 = vmatprep.subr.mxu0 0.0
  %1343 = vmatpush2.xpose.msra.mxu0 0.0
  %1344 = vmatprep.subr.mxu0 0.0
  %1345 = vmatpush2.xpose.msra.mxu0 0.0
  %1346 = vmatprep.subr.mxu0 0.0
  %1347 = vmatpush2.xpose.msra.mxu0 0.0
  %1348 = vmatprep.subr.mxu0 0.0
  %1349 = vmatpush2.xpose.msra.mxu0 0.0
  %1350 = vmatprep.subr.mxu0 0.0
  %1351 = vmatpush2.xpose.msra.mxu0 0.0
  %1352 = vmatprep.mubr.f32.mxu0 0.0
  %1353 = vmatmul.mubr.f32.gmra.mxu0 %v1286
  %v1354 = vpop.f32.mrf.mxu0
  %v1355 = vadd.f32 0.0, %v1354
  %v1356 = vpop.f32.mrf.mxu0
  %1357 = vdwg.mxu0
  %v1359 = vrot.slane %v1355, 1
  %v1361 = vadd.f32 %v141, %v1359
  %v1362 = vtanh.pop %v1361
  %1363 = vst.msk [vmem:[#allocation2 + $0x8] sm:$0x80] %vm800, %v1362
  %v1364 = vld [vmem:[#allocation2] sm:$0xff]
  %v1365 = vld [vmem:[#allocation2 + $0x8] sm:$0xff]
  %v1366 = vld [vmem:[%s5] sm:$0xf]
  %v1367 = vld [vmem:[%s6] sm:$0x1]
  %v1369 = vlaneseq
  %v1370 = vshrl.u32 %v1369, 7
  %v1371 = vsub.s32 0, %v1370
  %v1372 = vrot.slane %v1367, %v1371
  %v1375 = vsel %vm146, %v1364, 0
  %v1378 = vsel %vm146, %v1365, 0
  %v1381 = vsel %vm146, %v1366, 0
  %1383 = vmatprep.subr.mxu0 0.0
  %1384 = vmatpush1.xpose.msra.mxu0 0.0
  %1385 = vmatprep.subr.mxu0 0.0
  %1386 = vmatpush1.xpose.msra.mxu0 0.0
  %1387 = vmatprep.subr.mxu0 0.0
  %1388 = vmatpush1.xpose.msra.mxu0 0.0
  %1389 = vmatprep.subr.mxu0 0.0
  %1390 = vmatpush1.xpose.msra.mxu0 0.0
  %1391 = vmatprep.subr.mxu0 0.0
  %1392 = vmatpush1.xpose.msra.mxu0 0.0
  %1393 = vmatprep.subr.mxu0 0.0
  %1394 = vmatpush1.xpose.msra.mxu0 0.0
  %1395 = vmatprep.subr.mxu0 0.0
  %1396 = vmatpush1.xpose.msra.mxu0 0.0
  %1397 = vmatprep.subr.mxu0 0.0
  %1398 = vmatpush1.xpose.msra.mxu0 0.0
  %1399 = vmatprep.subr.mxu0 0.0
  %1400 = vmatpush1.xpose.msra.mxu0 0.0
  %1401 = vmatprep.subr.mxu0 0.0
  %1402 = vmatpush1.xpose.msra.mxu0 0.0
  %1403 = vmatprep.subr.mxu0 0.0
  %1404 = vmatpush1.xpose.msra.mxu0 0.0
  %1405 = vmatprep.subr.mxu0 0.0
  %1406 = vmatpush1.xpose.msra.mxu0 0.0
  %1407 = vmatprep.subr.mxu0 0.0
  %1408 = vmatpush1.xpose.msra.mxu0 0.0
  %1409 = vmatprep.subr.mxu0 0.0
  %1410 = vmatpush1.xpose.msra.mxu0 0.0
  %1411 = vmatprep.subr.mxu0 0.0
  %1412 = vmatpush1.xpose.msra.mxu0 0.0
  %1413 = vmatprep.subr.mxu0 0.0
  %1414 = vmatpush1.xpose.msra.mxu0 %v1381
  %1415 = vmatprep.subr.mxu0 0.0
  %1416 = vmatpush2.xpose.msra.mxu0 0.0
  %1417 = vmatprep.subr.mxu0 0.0
  %1418 = vmatpush2.xpose.msra.mxu0 0.0
  %1419 = vmatprep.subr.mxu0 0.0
  %1420 = vmatpush2.xpose.msra.mxu0 0.0
  %1421 = vmatprep.subr.mxu0 0.0
  %1422 = vmatpush2.xpose.msra.mxu0 0.0
  %1423 = vmatprep.subr.mxu0 0.0
  %1424 = vmatpush2.xpose.msra.mxu0 0.0
  %1425 = vmatprep.subr.mxu0 0.0
  %1426 = vmatpush2.xpose.msra.mxu0 0.0
  %1427 = vmatprep.subr.mxu0 0.0
  %1428 = vmatpush2.xpose.msra.mxu0 0.0
  %1429 = vmatprep.subr.mxu0 0.0
  %1430 = vmatpush2.xpose.msra.mxu0 0.0
  %1431 = vmatprep.subr.mxu0 0.0
  %1432 = vmatpush2.xpose.msra.mxu0 0.0
  %1433 = vmatprep.subr.mxu0 0.0
  %1434 = vmatpush2.xpose.msra.mxu0 0.0
  %1435 = vmatprep.subr.mxu0 0.0
  %1436 = vmatpush2.xpose.msra.mxu0 0.0
  %1437 = vmatprep.subr.mxu0 0.0
  %1438 = vmatpush2.xpose.msra.mxu0 0.0
  %1439 = vmatprep.subr.mxu0 0.0
  %1440 = vmatpush2.xpose.msra.mxu0 0.0
  %1441 = vmatprep.subr.mxu0 0.0
  %1442 = vmatpush2.xpose.msra.mxu0 0.0
  %1443 = vmatprep.subr.mxu0 0.0
  %1444 = vmatpush2.xpose.msra.mxu0 0.0
  %1445 = vmatprep.subr.mxu0 0.0
  %1446 = vmatpush2.xpose.msra.mxu0 0.0
  %1447 = vmatprep.mubr.f32.mxu0 0.0
  %1448 = vmatmul.mubr.f32.gmra.mxu0 %v1375
  %v1449 = vpop.f32.mrf.mxu0
  %v1450 = vadd.f32 %v1372, %v1449
  %v1451 = vpop.f32.mrf.mxu0
  %1452 = vmatprep.mubr.f32.mxu0 0.0
  %1453 = vmatmul.mubr.f32.gmra.mxu0 %v1378
  %v1454 = vpop.f32.mrf.mxu0
  %v1455 = vadd.f32 %v1372, %v1454
  %v1456 = vpop.f32.mrf.mxu0
  %1457 = vdwg.mxu0
  %1458 = vst.msk [vmem:[%s7] sm:$0xff] %vm39, %v1450
  %1459 = vst.msk [vmem:[%s7 + $0x8] sm:$0xff] %vm39, %v1455
  // Predicated region
  $region30: #{rnn_forward.1} parent=0 // pred_check
    _
  $region31: #{rnn_forward.1} parent=0 // pred_check_branch
    %1461 = sbr.rel (0) target = $region33
  $region32: #{rnn_forward.1} parent=0 // pred_region
    _
  $region33: #{rnn_forward.1} parent=0 // pred_fallthru
    _
  // Predicated region
  $region34: #{rnn_forward.1} parent=0 // pred_check
    _
  $region35: #{rnn_forward.1} parent=0 // pred_check_branch
    %1463 = sbr.rel (0) target = $region37
  $region36: #{rnn_forward.1} parent=0 // pred_region
    _
  $region37: #{rnn_forward.1} parent=0 // pred_fallthru
    _

</llo_original>
